<compile_context>
chip_gen: v7x
topology: tpu7x:2x2x1
jax: 0.10.0
libtpu: 0.0.40
codegen_flags: <defaults>
</compile_context>

<pallas_src>
import jax
import jax.numpy as jnp
from jax import lax
from jax.experimental import pallas as pl
from jax.experimental.pallas import tpu as pltpu


# -----------------------------------------------------------------------------
# Pallas kernel
#   x_ref   : (T*Bp, Kp)     rows = [x(t) | x(T-1-t) | 1 | 0-pad], time-major
#   wih_ref : (Kp, 16H)      fused input weights + bias row, gate-major/dir-minor
#   whh_ref : (4H, 16H)      block-diagonal recurrent weights (same lane layout)
#   out_ref : (T, Bp, 4H)    out[t] = h_all(t) * roll(h_all(t), 2H)
#                            lanes [h1f*h2f(t) | h1b*h2b(T-1-t) | dup | dup]
#   gx_scr  : (T, Bp, 16H)   gate pre-activations for all steps / directions
# Lane layout of the 16H axis: [i | f | o | g], each 4H wide, directions
# [lstm1_fwd, lstm1_bwd, lstm2_fwd, lstm2_bwd] minor (H lanes each).
# -----------------------------------------------------------------------------
def dual_rnn_kernel(x_ref, wih_ref, whh_ref, out_ref, gx_scr):
    T, Bp, DH = out_ref.shape      # DH = 4*H (4 directions stacked on lanes)
    H = DH // 4
    G = 4 * H                      # lanes per gate group (= DH)

    # Fused input projection (+ bias, + bwd time reversal) in one MXU matmul.
    gx_scr[...] = jnp.dot(
        x_ref[...], wih_ref[...], preferred_element_type=jnp.float32
    ).reshape(gx_scr.shape)

    whh_bd = whh_ref[...]          # hoisted once: (4H, 16H) block-diagonal

    def step(t, carry):
        h_all, c_all = carry       # (Bp, 4H) each: [h1f | h1b | h2f | h2b]
        gates = gx_scr[t] + jnp.dot(h_all, whh_bd,
                                    preferred_element_type=jnp.float32)
        # Gate-major layout: sigmoid over [i|f|o] (3 full 4H groups), tanh on g.
        sig = jax.nn.sigmoid(gates[:, :3 * G])
        i_g = sig[:, 0:G]
        f_g = sig[:, G:2 * G]
        o_g = sig[:, 2 * G:3 * G]
        g_g = jnp.tanh(gates[:, 3 * G:])
        c_new = f_g * c_all + i_g * g_g
        h_new = o_g * jnp.tanh(c_new)
        # [h1f*h2f | h1b*h2b | ...]: one XLU roll + full-tile multiply + one
        # lane-dense (Bp, 4H) store per step.
        out_ref[t] = h_new * pltpu.roll(h_new, 2 * H, axis=1)
        return h_new, c_new

    h0 = jnp.zeros((Bp, DH), jnp.float32)
    carry = (h0, h0)
    if T <= 32:
        # Small T: full unroll (register pressure per step is ~a dozen vregs).
        for t in range(T):
            carry = step(t, carry)
    else:
        # Long T: visible loop with moderate unroll bounds live ranges.
        lax.fori_loop(0, T, step, carry, unroll=8)


# -----------------------------------------------------------------------------
# Wrapper-side parameter packing
# -----------------------------------------------------------------------------
_GPERM = (0, 1, 3, 2)  # PyTorch gate order [i, f, g, o] -> kernel order [i, f, o, g]


def _pack_params(wih, whh, b, D, H):
    """wih: (4, D, 4H), whh: (4, H, 4H), b: (4, 1, 4H); dirs [1f, 1b, 2f, 2b]."""
    wih_g = wih.reshape(4, D, 4, H)[:, :, _GPERM, :]   # (dir, D, gate, H)
    whh_g = whh.reshape(4, H, 4, H)[:, :, _GPERM, :]   # (dir, Hin, gate, Hout)
    b_g = b.reshape(4, 4, H)[:, _GPERM, :]             # (dir, gate, H)

    # Input-projection weights: fwd dirs read x(t) (top D rows), bwd dirs read
    # x(T-1-t) (next D rows), last row is the bias (matched to a ones column).
    fwd_mask = jnp.array([1.0, 0.0, 1.0, 0.0], jnp.float32)
    wih_gd = jnp.transpose(wih_g, (1, 2, 0, 3))        # (D, gate, dir, H)
    top = (wih_gd * fwd_mask[None, None, :, None]).reshape(D, 16 * H)
    bot = (wih_gd * (1.0 - fwd_mask)[None, None, :, None]).reshape(D, 16 * H)
    b_row = jnp.transpose(b_g, (1, 0, 2)).reshape(1, 16 * H)
    wih_all = jnp.concatenate([top, bot, b_row], axis=0)   # (2D+1, 16H)

    # Block-diagonal recurrent weights: row block d (h of direction d) feeds
    # only that direction's gate lanes.
    eye4 = jnp.eye(4, dtype=jnp.float32)
    whh_bd = jnp.einsum("dkqj,de->dkqej", whh_g, eye4).reshape(4 * H, 16 * H)
    return wih_all, whh_bd


def dual_rnn_pallas(x_btd, wih, whh, b, hidden_size):
    """x_btd: (B, T, D) batch_first, like the PyTorch module.

    wih: (4, D, 4H), whh: (4, H, 4H), b: (4, 1, 4H) with direction order
    [lstm1_fwd, lstm1_bwd, lstm2_fwd, lstm2_bwd]; b = b_ih + b_hh.
    """
    B, T, D = x_btd.shape
    H = hidden_size
    Bp = ((B + 7) // 8) * 8          # pad batch to 8 sublanes
    K = 2 * D + 1
    Kp = ((K + 7) // 8) * 8          # pad contraction dim to 8

    x32 = x_btd.astype(jnp.float32)
    wih_all, whh_bd = _pack_params(wih.astype(jnp.float32),
                                   whh.astype(jnp.float32),
                                   b.astype(jnp.float32), D, H)
    wih_all = jnp.pad(wih_all, ((0, Kp - K), (0, 0)))

    # Time-major, batch padded; rows = [x(t) | x(T-1-t) | 1 | 0-pad].
    x_tm = jnp.transpose(x32, (1, 0, 2))                          # (T, B, D)
    x_tm = jnp.pad(x_tm, ((0, 0), (0, Bp - B), (0, 0)))           # (T, Bp, D)
    ones = jnp.ones((T, Bp, 1), jnp.float32)
    x_cat = jnp.concatenate([x_tm, x_tm[::-1], ones], axis=-1)    # (T, Bp, 2D+1)
    x_cat = jnp.pad(x_cat, ((0, 0), (0, 0), (0, Kp - K)))
    x_cat = x_cat.reshape(T * Bp, Kp)

    out = pl.pallas_call(
        dual_rnn_kernel,
        out_shape=jax.ShapeDtypeStruct((T, Bp, 4 * H), jnp.float32),
        in_specs=[pl.BlockSpec(memory_space=pltpu.MemorySpace.VMEM)] * 3,
        out_specs=pl.BlockSpec(memory_space=pltpu.MemorySpace.VMEM),
        scratch_shapes=[pltpu.VMEM((T, Bp, 16 * H), jnp.float32)],
        compiler_params=pltpu.CompilerParams(
            vmem_limit_bytes=48 * 1024 * 1024),
    )(x_cat, wih_all, whh_bd)

    # out[t] lanes: [h1f*h2f at time t | h1b*h2b at time T-1-t | dup | dup]
    p_f = out[:, :B, 0:H]                              # (T, B, H), time-aligned
    p_b = out[::-1, :B, H:2 * H]                       # un-reverse bwd time
    prod = jnp.concatenate([p_f, p_b], axis=-1)        # (T, B, 2H)
    prod = jnp.transpose(prod, (1, 0, 2))              # (B, T, 2H)
    return jnp.concatenate([prod, x32], axis=-1)       # (B, T, 2H + D)


# -----------------------------------------------------------------------------
# Pure-JAX reference (mirrors torch.nn.LSTM, bidirectional, batch_first)
# -----------------------------------------------------------------------------
def _lstm_dir_ref(x, wih, whh, b, rev, H):
    # x: (B, T, D); wih: (D, 4H); whh: (H, 4H); b: (1, 4H); gate order i,f,g,o
    if rev:
        x = x[:, ::-1, :]
    B = x.shape[0]
    h0 = jnp.zeros((B, H), jnp.float32)
    c0 = jnp.zeros((B, H), jnp.float32)

    def step(carry, xt):
        h, c = carry
        gates = xt @ wih + h @ whh + b
        i = jax.nn.sigmoid(gates[:, 0:H])
        f = jax.nn.sigmoid(gates[:, H:2 * H])
        g = jnp.tanh(gates[:, 2 * H:3 * H])
        o = jax.nn.sigmoid(gates[:, 3 * H:4 * H])
        c = f * c + i * g
        h = o * jnp.tanh(c)
        return (h, c), h

    _, hs = lax.scan(step, (h0, c0), jnp.swapaxes(x, 0, 1))
    hs = jnp.swapaxes(hs, 0, 1)  # (B, T, H)
    if rev:
        hs = hs[:, ::-1, :]
    return hs


def dual_rnn_ref(x, wih, whh, b, H):
    h1f = _lstm_dir_ref(x, wih[0], whh[0], b[0], False, H)
    h1b = _lstm_dir_ref(x, wih[1], whh[1], b[1], True, H)
    h2f = _lstm_dir_ref(x, wih[2], whh[2], b[2], False, H)
    h2b = _lstm_dir_ref(x, wih[3], whh[3], b[3], True, H)
    r1 = jnp.concatenate([h1f, h1b], axis=2)
    r2 = jnp.concatenate([h2f, h2b], axis=2)
    return jnp.concatenate([r1 * r2, x], axis=2)


# -----------------------------------------------------------------------------
# Deterministic parameter init + run
# -----------------------------------------------------------------------------
if __name__ == "__main__":
    B, T = 2, 8
    input_size, hidden_size = 16, 32
    D, H = input_size, hidden_size
    k = 1.0 / jnp.sqrt(jnp.float32(H))

    key = jax.random.PRNGKey(0)
    kx, kwih, kwhh, kbih, kbhh = jax.random.split(key, 5)

    x = jax.random.normal(kx, (B, T, D), dtype=jnp.float32)

    # 4 directions: [lstm1_fwd, lstm1_bwd, lstm2_fwd, lstm2_bwd].
    # PyTorch stores weight_ih as (4H, D); we store the transpose (D, 4H).
    wih = jax.random.uniform(kwih, (4, D, 4 * H), jnp.float32, -k, k)
    whh = jax.random.uniform(kwhh, (4, H, 4 * H), jnp.float32, -k, k)
    b_ih = jax.random.uniform(kbih, (4, 1, 4 * H), jnp.float32, -k, k)
    b_hh = jax.random.uniform(kbhh, (4, 1, 4 * H), jnp.float32, -k, k)
    b = b_ih + b_hh  # combined bias, equivalent to PyTorch's b_ih + b_hh

    out = dual_rnn_pallas(x, wih, whh, b, hidden_size)
    out = jax.block_until_ready(out)

    expected = dual_rnn_ref(x, wih, whh, b, H)
    assert out.shape == (B, T, 2 * H + D), out.shape
    assert jnp.allclose(out, expected, rtol=1e-3, atol=1e-3), (
        float(jnp.max(jnp.abs(out - expected))))

    print("KERNEL_OK")
</pallas_src>

<mosaic_0001>
module attributes {stable_mosaic.version = 11 : i64} {
  func.func @dual_rnn_kernel(%arg0: memref<64x40xf32, #tpu.memory_space<vmem>>, %arg1: memref<40x512xf32, #tpu.memory_space<vmem>>, %arg2: memref<128x512xf32, #tpu.memory_space<vmem>>, %arg3: memref<8x8x128xf32, #tpu.memory_space<vmem>>, %arg4: memref<8x8x512xf32, #tpu.memory_space<vmem>>) attributes {dimension_semantics = [], scalar_prefetch = 0 : i64, scratch_operands = 1 : i64, tpu.core_type = #tpu.core_type<tc>} {
    %c0 = arith.constant 0 : index
    %c0_0 = arith.constant 0 : index
    %0 = vector.load %arg0[%c0, %c0_0] : memref<64x40xf32, #tpu.memory_space<vmem>>, vector<64x40xf32>
    %c0_1 = arith.constant 0 : index
    %c0_2 = arith.constant 0 : index
    %1 = vector.load %arg1[%c0_1, %c0_2] : memref<40x512xf32, #tpu.memory_space<vmem>>, vector<40x512xf32>
    %cst = arith.constant dense<0.000000e+00> : vector<64x512xf32>
    %2 = tpu.matmul %0, %1, %cst {dimension_numbers = #tpu.dot_dimension_numbers<[1], [0], [0], [1], [0, 0, 1, 1], [], []>} : vector<64x40xf32>, vector<40x512xf32>, vector<64x512xf32> -> vector<64x512xf32>
    %3 = vector.shape_cast %2 : vector<64x512xf32> to vector<8x8x512xf32>
    %c0_3 = arith.constant 0 : index
    %c0_4 = arith.constant 0 : index
    %c0_5 = arith.constant 0 : index
    %4 = vector.load %arg4[%c0_3, %c0_4, %c0_5] : memref<8x8x512xf32, #tpu.memory_space<vmem>>, vector<8x8x512xf32>
    tpu.vector_store %arg4[%c0_3, %c0_4, %c0_5], %3 {strides = array<i32>} : memref<8x8x512xf32, #tpu.memory_space<vmem>>, vector<8x8x512xf32>,
    %c0_6 = arith.constant 0 : index
    %c0_7 = arith.constant 0 : index
    %5 = vector.load %arg2[%c0_6, %c0_7] : memref<128x512xf32, #tpu.memory_space<vmem>>, vector<128x512xf32>
    %cst_8 = arith.constant 0.000000e+00 : f32
    %6 = vector.broadcast %cst_8 : f32 to vector<8x128xf32>
    %c0_9 = arith.constant 0 : index
    %c0_10 = arith.constant 0 : index
    %c0_11 = arith.constant 0 : index
    %7 = vector.load %arg4[%c0_9, %c0_10, %c0_11] : memref<8x8x512xf32, #tpu.memory_space<vmem>>, vector<1x8x512xf32>
    %8 = vector.shape_cast %7 : vector<1x8x512xf32> to vector<8x512xf32>
    %cst_12 = arith.constant dense<0.000000e+00> : vector<8x512xf32>
    %9 = tpu.matmul %6, %5, %cst_12 {dimension_numbers = #tpu.dot_dimension_numbers<[1], [0], [0], [1], [0, 0, 1, 1], [], []>} : vector<8x128xf32>, vector<128x512xf32>, vector<8x512xf32> -> vector<8x512xf32>
    %10 = arith.addf %8, %9 : vector<8x512xf32>
    %11 = vector.extract_strided_slice %10 {offsets = [0, 0], sizes = [8, 384], strides = [1, 1]} : vector<8x512xf32> to vector<8x384xf32>
    %12 = arith.negf %11 : vector<8x384xf32>
    %13 = math.exp %12 : vector<8x384xf32>
    %cst_13 = arith.constant 1.000000e+00 : f32
    %14 = vector.broadcast %cst_13 : f32 to vector<8x384xf32>
    %15 = arith.addf %14, %13 : vector<8x384xf32>
    %16 = arith.divf %14, %15 : vector<8x384xf32>
    %17 = vector.extract_strided_slice %16 {offsets = [0, 0], sizes = [8, 128], strides = [1, 1]} : vector<8x384xf32> to vector<8x128xf32>
    %18 = vector.extract_strided_slice %16 {offsets = [0, 128], sizes = [8, 128], strides = [1, 1]} : vector<8x384xf32> to vector<8x128xf32>
    %19 = vector.extract_strided_slice %16 {offsets = [0, 256], sizes = [8, 128], strides = [1, 1]} : vector<8x384xf32> to vector<8x128xf32>
    %20 = vector.extract_strided_slice %10 {offsets = [0, 384], sizes = [8, 128], strides = [1, 1]} : vector<8x512xf32> to vector<8x128xf32>
    %21 = math.tanh %20 : vector<8x128xf32>
    %22 = arith.mulf %18, %6 : vector<8x128xf32>
    %23 = arith.mulf %17, %21 : vector<8x128xf32>
    %24 = arith.addf %22, %23 : vector<8x128xf32>
    %25 = math.tanh %24 : vector<8x128xf32>
    %26 = arith.mulf %19, %25 : vector<8x128xf32>
    %c64_i32 = arith.constant 64 : i32
    %27 = tpu.dynamic_rotate %26 by %c64_i32 dim 1 : vector<8x128xf32>, i32 -> vector<8x128xf32>
    %28 = arith.mulf %26, %27 : vector<8x128xf32>
    %c0_14 = arith.constant 0 : index
    %c0_15 = arith.constant 0 : index
    %c0_16 = arith.constant 0 : index
    %29 = vector.load %arg3[%c0_14, %c0_15, %c0_16] : memref<8x8x128xf32, #tpu.memory_space<vmem>>, vector<1x8x128xf32>
    %30 = vector.shape_cast %29 : vector<1x8x128xf32> to vector<8x128xf32>
    %31 = vector.shape_cast %28 : vector<8x128xf32> to vector<1x8x128xf32>
    tpu.vector_store %arg3[%c0_14, %c0_15, %c0_16], %31 {strides = array<i32>} : memref<8x8x128xf32, #tpu.memory_space<vmem>>, vector<1x8x128xf32>,
    %c1 = arith.constant 1 : index
    %c0_17 = arith.constant 0 : index
    %c0_18 = arith.constant 0 : index
    %32 = vector.load %arg4[%c1, %c0_17, %c0_18] : memref<8x8x512xf32, #tpu.memory_space<vmem>>, vector<1x8x512xf32>
    %33 = vector.shape_cast %32 : vector<1x8x512xf32> to vector<8x512xf32>
    %cst_19 = arith.constant dense<0.000000e+00> : vector<8x512xf32>
    %34 = tpu.matmul %26, %5, %cst_19 {dimension_numbers = #tpu.dot_dimension_numbers<[1], [0], [0], [1], [0, 0, 1, 1], [], []>} : vector<8x128xf32>, vector<128x512xf32>, vector<8x512xf32> -> vector<8x512xf32>
    %35 = arith.addf %33, %34 : vector<8x512xf32>
    %36 = vector.extract_strided_slice %35 {offsets = [0, 0], sizes = [8, 384], strides = [1, 1]} : vector<8x512xf32> to vector<8x384xf32>
    %37 = arith.negf %36 : vector<8x384xf32>
    %38 = math.exp %37 : vector<8x384xf32>
    %cst_20 = arith.constant 1.000000e+00 : f32
    %39 = vector.broadcast %cst_20 : f32 to vector<8x384xf32>
    %40 = arith.addf %39, %38 : vector<8x384xf32>
    %41 = arith.divf %39, %40 : vector<8x384xf32>
    %42 = vector.extract_strided_slice %41 {offsets = [0, 0], sizes = [8, 128], strides = [1, 1]} : vector<8x384xf32> to vector<8x128xf32>
    %43 = vector.extract_strided_slice %41 {offsets = [0, 128], sizes = [8, 128], strides = [1, 1]} : vector<8x384xf32> to vector<8x128xf32>
    %44 = vector.extract_strided_slice %41 {offsets = [0, 256], sizes = [8, 128], strides = [1, 1]} : vector<8x384xf32> to vector<8x128xf32>
    %45 = vector.extract_strided_slice %35 {offsets = [0, 384], sizes = [8, 128], strides = [1, 1]} : vector<8x512xf32> to vector<8x128xf32>
    %46 = math.tanh %45 : vector<8x128xf32>
    %47 = arith.mulf %43, %24 : vector<8x128xf32>
    %48 = arith.mulf %42, %46 : vector<8x128xf32>
    %49 = arith.addf %47, %48 : vector<8x128xf32>
    %50 = math.tanh %49 : vector<8x128xf32>
    %51 = arith.mulf %44, %50 : vector<8x128xf32>
    %c64_i32_21 = arith.constant 64 : i32
    %52 = tpu.dynamic_rotate %51 by %c64_i32_21 dim 1 : vector<8x128xf32>, i32 -> vector<8x128xf32>
    %53 = arith.mulf %51, %52 : vector<8x128xf32>
    %c1_22 = arith.constant 1 : index
    %c0_23 = arith.constant 0 : index
    %c0_24 = arith.constant 0 : index
    %54 = vector.load %arg3[%c1_22, %c0_23, %c0_24] : memref<8x8x128xf32, #tpu.memory_space<vmem>>, vector<1x8x128xf32>
    %55 = vector.shape_cast %54 : vector<1x8x128xf32> to vector<8x128xf32>
    %56 = vector.shape_cast %53 : vector<8x128xf32> to vector<1x8x128xf32>
    tpu.vector_store %arg3[%c1_22, %c0_23, %c0_24], %56 {strides = array<i32>} : memref<8x8x128xf32, #tpu.memory_space<vmem>>, vector<1x8x128xf32>,
    %c2 = arith.constant 2 : index
    %c0_25 = arith.constant 0 : index
    %c0_26 = arith.constant 0 : index
    %57 = vector.load %arg4[%c2, %c0_25, %c0_26] : memref<8x8x512xf32, #tpu.memory_space<vmem>>, vector<1x8x512xf32>
    %58 = vector.shape_cast %57 : vector<1x8x512xf32> to vector<8x512xf32>
    %cst_27 = arith.constant dense<0.000000e+00> : vector<8x512xf32>
    %59 = tpu.matmul %51, %5, %cst_27 {dimension_numbers = #tpu.dot_dimension_numbers<[1], [0], [0], [1], [0, 0, 1, 1], [], []>} : vector<8x128xf32>, vector<128x512xf32>, vector<8x512xf32> -> vector<8x512xf32>
    %60 = arith.addf %58, %59 : vector<8x512xf32>
    %61 = vector.extract_strided_slice %60 {offsets = [0, 0], sizes = [8, 384], strides = [1, 1]} : vector<8x512xf32> to vector<8x384xf32>
    %62 = arith.negf %61 : vector<8x384xf32>
    %63 = math.exp %62 : vector<8x384xf32>
    %cst_28 = arith.constant 1.000000e+00 : f32
    %64 = vector.broadcast %cst_28 : f32 to vector<8x384xf32>
    %65 = arith.addf %64, %63 : vector<8x384xf32>
    %66 = arith.divf %64, %65 : vector<8x384xf32>
    %67 = vector.extract_strided_slice %66 {offsets = [0, 0], sizes = [8, 128], strides = [1, 1]} : vector<8x384xf32> to vector<8x128xf32>
    %68 = vector.extract_strided_slice %66 {offsets = [0, 128], sizes = [8, 128], strides = [1, 1]} : vector<8x384xf32> to vector<8x128xf32>
    %69 = vector.extract_strided_slice %66 {offsets = [0, 256], sizes = [8, 128], strides = [1, 1]} : vector<8x384xf32> to vector<8x128xf32>
    %70 = vector.extract_strided_slice %60 {offsets = [0, 384], sizes = [8, 128], strides = [1, 1]} : vector<8x512xf32> to vector<8x128xf32>
    %71 = math.tanh %70 : vector<8x128xf32>
    %72 = arith.mulf %68, %49 : vector<8x128xf32>
    %73 = arith.mulf %67, %71 : vector<8x128xf32>
    %74 = arith.addf %72, %73 : vector<8x128xf32>
    %75 = math.tanh %74 : vector<8x128xf32>
    %76 = arith.mulf %69, %75 : vector<8x128xf32>
    %c64_i32_29 = arith.constant 64 : i32
    %77 = tpu.dynamic_rotate %76 by %c64_i32_29 dim 1 : vector<8x128xf32>, i32 -> vector<8x128xf32>
    %78 = arith.mulf %76, %77 : vector<8x128xf32>
    %c2_30 = arith.constant 2 : index
    %c0_31 = arith.constant 0 : index
    %c0_32 = arith.constant 0 : index
    %79 = vector.load %arg3[%c2_30, %c0_31, %c0_32] : memref<8x8x128xf32, #tpu.memory_space<vmem>>, vector<1x8x128xf32>
    %80 = vector.shape_cast %79 : vector<1x8x128xf32> to vector<8x128xf32>
    %81 = vector.shape_cast %78 : vector<8x128xf32> to vector<1x8x128xf32>
    tpu.vector_store %arg3[%c2_30, %c0_31, %c0_32], %81 {strides = array<i32>} : memref<8x8x128xf32, #tpu.memory_space<vmem>>, vector<1x8x128xf32>,
    %c3 = arith.constant 3 : index
    %c0_33 = arith.constant 0 : index
    %c0_34 = arith.constant 0 : index
    %82 = vector.load %arg4[%c3, %c0_33, %c0_34] : memref<8x8x512xf32, #tpu.memory_space<vmem>>, vector<1x8x512xf32>
    %83 = vector.shape_cast %82 : vector<1x8x512xf32> to vector<8x512xf32>
    %cst_35 = arith.constant dense<0.000000e+00> : vector<8x512xf32>
    %84 = tpu.matmul %76, %5, %cst_35 {dimension_numbers = #tpu.dot_dimension_numbers<[1], [0], [0], [1], [0, 0, 1, 1], [], []>} : vector<8x128xf32>, vector<128x512xf32>, vector<8x512xf32> -> vector<8x512xf32>
    %85 = arith.addf %83, %84 : vector<8x512xf32>
    %86 = vector.extract_strided_slice %85 {offsets = [0, 0], sizes = [8, 384], strides = [1, 1]} : vector<8x512xf32> to vector<8x384xf32>
    %87 = arith.negf %86 : vector<8x384xf32>
    %88 = math.exp %87 : vector<8x384xf32>
    %cst_36 = arith.constant 1.000000e+00 : f32
    %89 = vector.broadcast %cst_36 : f32 to vector<8x384xf32>
    %90 = arith.addf %89, %88 : vector<8x384xf32>
    %91 = arith.divf %89, %90 : vector<8x384xf32>
    %92 = vector.extract_strided_slice %91 {offsets = [0, 0], sizes = [8, 128], strides = [1, 1]} : vector<8x384xf32> to vector<8x128xf32>
    %93 = vector.extract_strided_slice %91 {offsets = [0, 128], sizes = [8, 128], strides = [1, 1]} : vector<8x384xf32> to vector<8x128xf32>
    %94 = vector.extract_strided_slice %91 {offsets = [0, 256], sizes = [8, 128], strides = [1, 1]} : vector<8x384xf32> to vector<8x128xf32>
    %95 = vector.extract_strided_slice %85 {offsets = [0, 384], sizes = [8, 128], strides = [1, 1]} : vector<8x512xf32> to vector<8x128xf32>
    %96 = math.tanh %95 : vector<8x128xf32>
    %97 = arith.mulf %93, %74 : vector<8x128xf32>
    %98 = arith.mulf %92, %96 : vector<8x128xf32>
    %99 = arith.addf %97, %98 : vector<8x128xf32>
    %100 = math.tanh %99 : vector<8x128xf32>
    %101 = arith.mulf %94, %100 : vector<8x128xf32>
    %c64_i32_37 = arith.constant 64 : i32
    %102 = tpu.dynamic_rotate %101 by %c64_i32_37 dim 1 : vector<8x128xf32>, i32 -> vector<8x128xf32>
    %103 = arith.mulf %101, %102 : vector<8x128xf32>
    %c3_38 = arith.constant 3 : index
    %c0_39 = arith.constant 0 : index
    %c0_40 = arith.constant 0 : index
    %104 = vector.load %arg3[%c3_38, %c0_39, %c0_40] : memref<8x8x128xf32, #tpu.memory_space<vmem>>, vector<1x8x128xf32>
    %105 = vector.shape_cast %104 : vector<1x8x128xf32> to vector<8x128xf32>
    %106 = vector.shape_cast %103 : vector<8x128xf32> to vector<1x8x128xf32>
    tpu.vector_store %arg3[%c3_38, %c0_39, %c0_40], %106 {strides = array<i32>} : memref<8x8x128xf32, #tpu.memory_space<vmem>>, vector<1x8x128xf32>,
    %c4 = arith.constant 4 : index
    %c0_41 = arith.constant 0 : index
    %c0_42 = arith.constant 0 : index
    %107 = vector.load %arg4[%c4, %c0_41, %c0_42] : memref<8x8x512xf32, #tpu.memory_space<vmem>>, vector<1x8x512xf32>
    %108 = vector.shape_cast %107 : vector<1x8x512xf32> to vector<8x512xf32>
    %cst_43 = arith.constant dense<0.000000e+00> : vector<8x512xf32>
    %109 = tpu.matmul %101, %5, %cst_43 {dimension_numbers = #tpu.dot_dimension_numbers<[1], [0], [0], [1], [0, 0, 1, 1], [], []>} : vector<8x128xf32>, vector<128x512xf32>, vector<8x512xf32> -> vector<8x512xf32>
    %110 = arith.addf %108, %109 : vector<8x512xf32>
    %111 = vector.extract_strided_slice %110 {offsets = [0, 0], sizes = [8, 384], strides = [1, 1]} : vector<8x512xf32> to vector<8x384xf32>
    %112 = arith.negf %111 : vector<8x384xf32>
    %113 = math.exp %112 : vector<8x384xf32>
    %cst_44 = arith.constant 1.000000e+00 : f32
    %114 = vector.broadcast %cst_44 : f32 to vector<8x384xf32>
    %115 = arith.addf %114, %113 : vector<8x384xf32>
    %116 = arith.divf %114, %115 : vector<8x384xf32>
    %117 = vector.extract_strided_slice %116 {offsets = [0, 0], sizes = [8, 128], strides = [1, 1]} : vector<8x384xf32> to vector<8x128xf32>
    %118 = vector.extract_strided_slice %116 {offsets = [0, 128], sizes = [8, 128], strides = [1, 1]} : vector<8x384xf32> to vector<8x128xf32>
    %119 = vector.extract_strided_slice %116 {offsets = [0, 256], sizes = [8, 128], strides = [1, 1]} : vector<8x384xf32> to vector<8x128xf32>
    %120 = vector.extract_strided_slice %110 {offsets = [0, 384], sizes = [8, 128], strides = [1, 1]} : vector<8x512xf32> to vector<8x128xf32>
    %121 = math.tanh %120 : vector<8x128xf32>
    %122 = arith.mulf %118, %99 : vector<8x128xf32>
    %123 = arith.mulf %117, %121 : vector<8x128xf32>
    %124 = arith.addf %122, %123 : vector<8x128xf32>
    %125 = math.tanh %124 : vector<8x128xf32>
    %126 = arith.mulf %119, %125 : vector<8x128xf32>
    %c64_i32_45 = arith.constant 64 : i32
    %127 = tpu.dynamic_rotate %126 by %c64_i32_45 dim 1 : vector<8x128xf32>, i32 -> vector<8x128xf32>
    %128 = arith.mulf %126, %127 : vector<8x128xf32>
    %c4_46 = arith.constant 4 : index
    %c0_47 = arith.constant 0 : index
    %c0_48 = arith.constant 0 : index
    %129 = vector.load %arg3[%c4_46, %c0_47, %c0_48] : memref<8x8x128xf32, #tpu.memory_space<vmem>>, vector<1x8x128xf32>
    %130 = vector.shape_cast %129 : vector<1x8x128xf32> to vector<8x128xf32>
    %131 = vector.shape_cast %128 : vector<8x128xf32> to vector<1x8x128xf32>
    tpu.vector_store %arg3[%c4_46, %c0_47, %c0_48], %131 {strides = array<i32>} : memref<8x8x128xf32, #tpu.memory_space<vmem>>, vector<1x8x128xf32>,
    %c5 = arith.constant 5 : index
    %c0_49 = arith.constant 0 : index
    %c0_50 = arith.constant 0 : index
    %132 = vector.load %arg4[%c5, %c0_49, %c0_50] : memref<8x8x512xf32, #tpu.memory_space<vmem>>, vector<1x8x512xf32>
    %133 = vector.shape_cast %132 : vector<1x8x512xf32> to vector<8x512xf32>
    %cst_51 = arith.constant dense<0.000000e+00> : vector<8x512xf32>
    %134 = tpu.matmul %126, %5, %cst_51 {dimension_numbers = #tpu.dot_dimension_numbers<[1], [0], [0], [1], [0, 0, 1, 1], [], []>} : vector<8x128xf32>, vector<128x512xf32>, vector<8x512xf32> -> vector<8x512xf32>
    %135 = arith.addf %133, %134 : vector<8x512xf32>
    %136 = vector.extract_strided_slice %135 {offsets = [0, 0], sizes = [8, 384], strides = [1, 1]} : vector<8x512xf32> to vector<8x384xf32>
    %137 = arith.negf %136 : vector<8x384xf32>
    %138 = math.exp %137 : vector<8x384xf32>
    %cst_52 = arith.constant 1.000000e+00 : f32
    %139 = vector.broadcast %cst_52 : f32 to vector<8x384xf32>
    %140 = arith.addf %139, %138 : vector<8x384xf32>
    %141 = arith.divf %139, %140 : vector<8x384xf32>
    %142 = vector.extract_strided_slice %141 {offsets = [0, 0], sizes = [8, 128], strides = [1, 1]} : vector<8x384xf32> to vector<8x128xf32>
    %143 = vector.extract_strided_slice %141 {offsets = [0, 128], sizes = [8, 128], strides = [1, 1]} : vector<8x384xf32> to vector<8x128xf32>
    %144 = vector.extract_strided_slice %141 {offsets = [0, 256], sizes = [8, 128], strides = [1, 1]} : vector<8x384xf32> to vector<8x128xf32>
    %145 = vector.extract_strided_slice %135 {offsets = [0, 384], sizes = [8, 128], strides = [1, 1]} : vector<8x512xf32> to vector<8x128xf32>
    %146 = math.tanh %145 : vector<8x128xf32>
    %147 = arith.mulf %143, %124 : vector<8x128xf32>
    %148 = arith.mulf %142, %146 : vector<8x128xf32>
    %149 = arith.addf %147, %148 : vector<8x128xf32>
    %150 = math.tanh %149 : vector<8x128xf32>
    %151 = arith.mulf %144, %150 : vector<8x128xf32>
    %c64_i32_53 = arith.constant 64 : i32
    %152 = tpu.dynamic_rotate %151 by %c64_i32_53 dim 1 : vector<8x128xf32>, i32 -> vector<8x128xf32>
    %153 = arith.mulf %151, %152 : vector<8x128xf32>
    %c5_54 = arith.constant 5 : index
    %c0_55 = arith.constant 0 : index
    %c0_56 = arith.constant 0 : index
    %154 = vector.load %arg3[%c5_54, %c0_55, %c0_56] : memref<8x8x128xf32, #tpu.memory_space<vmem>>, vector<1x8x128xf32>
    %155 = vector.shape_cast %154 : vector<1x8x128xf32> to vector<8x128xf32>
    %156 = vector.shape_cast %153 : vector<8x128xf32> to vector<1x8x128xf32>
    tpu.vector_store %arg3[%c5_54, %c0_55, %c0_56], %156 {strides = array<i32>} : memref<8x8x128xf32, #tpu.memory_space<vmem>>, vector<1x8x128xf32>,
    %c6 = arith.constant 6 : index
    %c0_57 = arith.constant 0 : index
    %c0_58 = arith.constant 0 : index
    %157 = vector.load %arg4[%c6, %c0_57, %c0_58] : memref<8x8x512xf32, #tpu.memory_space<vmem>>, vector<1x8x512xf32>
    %158 = vector.shape_cast %157 : vector<1x8x512xf32> to vector<8x512xf32>
    %cst_59 = arith.constant dense<0.000000e+00> : vector<8x512xf32>
    %159 = tpu.matmul %151, %5, %cst_59 {dimension_numbers = #tpu.dot_dimension_numbers<[1], [0], [0], [1], [0, 0, 1, 1], [], []>} : vector<8x128xf32>, vector<128x512xf32>, vector<8x512xf32> -> vector<8x512xf32>
    %160 = arith.addf %158, %159 : vector<8x512xf32>
    %161 = vector.extract_strided_slice %160 {offsets = [0, 0], sizes = [8, 384], strides = [1, 1]} : vector<8x512xf32> to vector<8x384xf32>
    %162 = arith.negf %161 : vector<8x384xf32>
    %163 = math.exp %162 : vector<8x384xf32>
    %cst_60 = arith.constant 1.000000e+00 : f32
    %164 = vector.broadcast %cst_60 : f32 to vector<8x384xf32>
    %165 = arith.addf %164, %163 : vector<8x384xf32>
    %166 = arith.divf %164, %165 : vector<8x384xf32>
    %167 = vector.extract_strided_slice %166 {offsets = [0, 0], sizes = [8, 128], strides = [1, 1]} : vector<8x384xf32> to vector<8x128xf32>
    %168 = vector.extract_strided_slice %166 {offsets = [0, 128], sizes = [8, 128], strides = [1, 1]} : vector<8x384xf32> to vector<8x128xf32>
    %169 = vector.extract_strided_slice %166 {offsets = [0, 256], sizes = [8, 128], strides = [1, 1]} : vector<8x384xf32> to vector<8x128xf32>
    %170 = vector.extract_strided_slice %160 {offsets = [0, 384], sizes = [8, 128], strides = [1, 1]} : vector<8x512xf32> to vector<8x128xf32>
    %171 = math.tanh %170 : vector<8x128xf32>
    %172 = arith.mulf %168, %149 : vector<8x128xf32>
    %173 = arith.mulf %167, %171 : vector<8x128xf32>
    %174 = arith.addf %172, %173 : vector<8x128xf32>
    %175 = math.tanh %174 : vector<8x128xf32>
    %176 = arith.mulf %169, %175 : vector<8x128xf32>
    %c64_i32_61 = arith.constant 64 : i32
    %177 = tpu.dynamic_rotate %176 by %c64_i32_61 dim 1 : vector<8x128xf32>, i32 -> vector<8x128xf32>
    %178 = arith.mulf %176, %177 : vector<8x128xf32>
    %c6_62 = arith.constant 6 : index
    %c0_63 = arith.constant 0 : index
    %c0_64 = arith.constant 0 : index
    %179 = vector.load %arg3[%c6_62, %c0_63, %c0_64] : memref<8x8x128xf32, #tpu.memory_space<vmem>>, vector<1x8x128xf32>
    %180 = vector.shape_cast %179 : vector<1x8x128xf32> to vector<8x128xf32>
    %181 = vector.shape_cast %178 : vector<8x128xf32> to vector<1x8x128xf32>
    tpu.vector_store %arg3[%c6_62, %c0_63, %c0_64], %181 {strides = array<i32>} : memref<8x8x128xf32, #tpu.memory_space<vmem>>, vector<1x8x128xf32>,
    %c7 = arith.constant 7 : index
    %c0_65 = arith.constant 0 : index
    %c0_66 = arith.constant 0 : index
    %182 = vector.load %arg4[%c7, %c0_65, %c0_66] : memref<8x8x512xf32, #tpu.memory_space<vmem>>, vector<1x8x512xf32>
    %183 = vector.shape_cast %182 : vector<1x8x512xf32> to vector<8x512xf32>
    %cst_67 = arith.constant dense<0.000000e+00> : vector<8x512xf32>
    %184 = tpu.matmul %176, %5, %cst_67 {dimension_numbers = #tpu.dot_dimension_numbers<[1], [0], [0], [1], [0, 0, 1, 1], [], []>} : vector<8x128xf32>, vector<128x512xf32>, vector<8x512xf32> -> vector<8x512xf32>
    %185 = arith.addf %183, %184 : vector<8x512xf32>
    %186 = vector.extract_strided_slice %185 {offsets = [0, 0], sizes = [8, 384], strides = [1, 1]} : vector<8x512xf32> to vector<8x384xf32>
    %187 = arith.negf %186 : vector<8x384xf32>
    %188 = math.exp %187 : vector<8x384xf32>
    %cst_68 = arith.constant 1.000000e+00 : f32
    %189 = vector.broadcast %cst_68 : f32 to vector<8x384xf32>
    %190 = arith.addf %189, %188 : vector<8x384xf32>
    %191 = arith.divf %189, %190 : vector<8x384xf32>
    %192 = vector.extract_strided_slice %191 {offsets = [0, 0], sizes = [8, 128], strides = [1, 1]} : vector<8x384xf32> to vector<8x128xf32>
    %193 = vector.extract_strided_slice %191 {offsets = [0, 128], sizes = [8, 128], strides = [1, 1]} : vector<8x384xf32> to vector<8x128xf32>
    %194 = vector.extract_strided_slice %191 {offsets = [0, 256], sizes = [8, 128], strides = [1, 1]} : vector<8x384xf32> to vector<8x128xf32>
    %195 = vector.extract_strided_slice %185 {offsets = [0, 384], sizes = [8, 128], strides = [1, 1]} : vector<8x512xf32> to vector<8x128xf32>
    %196 = math.tanh %195 : vector<8x128xf32>
    %197 = arith.mulf %193, %174 : vector<8x128xf32>
    %198 = arith.mulf %192, %196 : vector<8x128xf32>
    %199 = arith.addf %197, %198 : vector<8x128xf32>
    %200 = math.tanh %199 : vector<8x128xf32>
    %201 = arith.mulf %194, %200 : vector<8x128xf32>
    %c64_i32_69 = arith.constant 64 : i32
    %202 = tpu.dynamic_rotate %201 by %c64_i32_69 dim 1 : vector<8x128xf32>, i32 -> vector<8x128xf32>
    %203 = arith.mulf %201, %202 : vector<8x128xf32>
    %c7_70 = arith.constant 7 : index
    %c0_71 = arith.constant 0 : index
    %c0_72 = arith.constant 0 : index
    %204 = vector.load %arg3[%c7_70, %c0_71, %c0_72] : memref<8x8x128xf32, #tpu.memory_space<vmem>>, vector<1x8x128xf32>
    %205 = vector.shape_cast %204 : vector<1x8x128xf32> to vector<8x128xf32>
    %206 = vector.shape_cast %203 : vector<8x128xf32> to vector<1x8x128xf32>
    tpu.vector_store %arg3[%c7_70, %c0_71, %c0_72], %206 {strides = array<i32>} : memref<8x8x128xf32, #tpu.memory_space<vmem>>, vector<1x8x128xf32>,
    return
  }
}

</mosaic_0001>

<llo_original>
// kernel: tpu_custom_call.1
$region0: #{tpu_custom_call.1}
  #allocation0 [shape = 'u32[]', space=smem, size = 0x4, offset = 0x4, fixed_abs, tag = 'smem constant byte address 0x4 - core index']
  #allocation1 [shape = 'u32[144,128]{1,0:T(1,128)}', space=vmem, size = 0x12000, scoped, tag = 'internal scratch']
  #allocation2 [shape = 'f32[8,8,512]{2,1,0:T(8,128)}', space=vmem, size = 0x20000, scoped, tag = 'scratch operand']
  %s0 = inlined_call_operand.vmem [shape: f32[64,40], index: 0, kind: input, shape index: {}]
  %s1 = inlined_call_operand.hbm [shape: f32[40,512], index: 1, kind: input, shape index: {}]
  %s2 = inlined_call_operand.hbm [shape: f32[128,512], index: 2, kind: input, shape index: {}]
  %s3 = inlined_call_operand.hbm [shape: f32[8,8,128], index: 3, kind: output, shape index: {}]
  %s4 = sld [smem:[#allocation0]]
  $region30: #{tpu_custom_call.1} parent=0
    _
  %s6 = ssub.s32 1, %s4
  %s7 = scalar_select 0, %s6, %s4
  $region1: #{tpu_custom_call.1} parent=0
    #allocation3 [shape = 'u8[81920]{0}', space=vmem, size = 0x14000, scoped, tag = 'input window, operand 1, single buffered']
    #allocation4 [shape = 's32[1]{0}', space=sflag, size = 0x4, scoped, tag = 'scoped memory for tpu_custom_call.1']
    #allocation5 [shape = 's32[1]{0}', space=sflag, size = 0x4, scoped, tag = 'scoped memory for tpu_custom_call.1']
    #allocation6 [shape = 'u8[262144]{0}', space=vmem, size = 0x40000, scoped, tag = 'input window, operand 2, single buffered']
    #allocation7 [shape = 's32[1]{0}', space=sflag, size = 0x4, scoped, tag = 'scoped memory for tpu_custom_call.1']
    #allocation8 [shape = 'u8[32768]{0}', space=vmem, size = 0x8000, scoped, tag = 'output window, operand 0, single buffered']
    %8 = vsyncpa [#allocation4], 0
    %9 = vsyncpa [#allocation7], 0
    %10 = vsyncpa [#allocation5], 0
    // Predicated region
    $region2: #{tpu_custom_call.1} parent=1 // pred_check
      _
    $region3: #{tpu_custom_call.1} parent=1 // pred_check_branch
      %12 = sbr.rel (0) target = $region5
    $region4: #{tpu_custom_call.1} parent=1 // pred_region
      _
    $region5: #{tpu_custom_call.1} parent=1 // pred_fallthru
      _
    // Predicated region
    $region6: #{tpu_custom_call.1} parent=1 // pred_check
      _
    $region7: #{tpu_custom_call.1} parent=1 // pred_check_branch
      %14 = sbr.rel (0) target = $region9
    $region8: #{tpu_custom_call.1} parent=1 // pred_region
      %s16 = ssub.s32 2560, 2560
      %17 = vsyncadd [#allocation4], %s16
      %s18 = sshll.u32 [#allocation3], 4
      %s19 = int_to_ptr.vmem [resolvable:$true] %s18
      %24 = dma.hbm_to_vmem [thread:$0]  %s1, 2560, %s19, [#allocation4], 512, 512, 32
    $region9: #{tpu_custom_call.1} parent=1 // pred_fallthru
      _
    // Predicated region
    $region10: #{tpu_custom_call.1} parent=1 // pred_check
      _
    $region11: #{tpu_custom_call.1} parent=1 // pred_check_branch
      %26 = sbr.rel (0) target = $region13
    $region12: #{tpu_custom_call.1} parent=1 // pred_region
      %s28 = ssub.s32 8192, 8192
      %29 = vsyncadd [#allocation7], %s28
      %s30 = sshll.u32 [#allocation6], 4
      %s31 = int_to_ptr.vmem [resolvable:$true] %s30
      %36 = dma.hbm_to_vmem [thread:$0]  %s2, 8192, %s31, [#allocation7], 512, 512, 32
    $region13: #{tpu_custom_call.1} parent=1 // pred_fallthru
      _
    // Predicated region
    $region14: #{tpu_custom_call.1} parent=1 // pred_check
      _
    $region15: #{tpu_custom_call.1} parent=1 // pred_check_branch
      %38 = sbr.rel (0) target = $region17
    $region16: #{tpu_custom_call.1} parent=1 // pred_region
      %39 = dma.done [#allocation4], 2560
    $region17: #{tpu_custom_call.1} parent=1 // pred_fallthru
      _
    // Predicated region
    $region18: #{tpu_custom_call.1} parent=1 // pred_check
      _
    $region19: #{tpu_custom_call.1} parent=1 // pred_check_branch
      %41 = sbr.rel (0) target = $region21
    $region20: #{tpu_custom_call.1} parent=1 // pred_region
      %42 = dma.done [#allocation7], 8192
    $region21: #{tpu_custom_call.1} parent=1 // pred_fallthru
      _
    %v43 = vld [vmem:[%s0] sm:$0xff]
    %v44 = vld [vmem:[%s0 + $0x8] sm:$0xff]
    %v45 = vld [vmem:[%s0 + $0x10] sm:$0xff]
    %v46 = vld [vmem:[%s0 + $0x18] sm:$0xff]
    %v47 = vld [vmem:[%s0 + $0x20] sm:$0xff]
    %v48 = vld [vmem:[%s0 + $0x28] sm:$0xff]
    %v49 = vld [vmem:[%s0 + $0x30] sm:$0xff]
    %v50 = vld [vmem:[%s0 + $0x38] sm:$0xff]
    %v51 = vld [vmem:[#allocation3] sm:$0xff]
    %v52 = vld [vmem:[#allocation3 + $0x8] sm:$0xff]
    %v53 = vld [vmem:[#allocation3 + $0x10] sm:$0xff]
    %v54 = vld [vmem:[#allocation3 + $0x18] sm:$0xff]
    %v55 = vld [vmem:[#allocation3 + $0x20] sm:$0xff]
    %v56 = vld [vmem:[#allocation3 + $0x28] sm:$0xff]
    %v57 = vld [vmem:[#allocation3 + $0x30] sm:$0xff]
    %v58 = vld [vmem:[#allocation3 + $0x38] sm:$0xff]
    %v59 = vld [vmem:[#allocation3 + $0x40] sm:$0xff]
    %v60 = vld [vmem:[#allocation3 + $0x48] sm:$0xff]
    %v61 = vld [vmem:[#allocation3 + $0x50] sm:$0xff]
    %v62 = vld [vmem:[#allocation3 + $0x58] sm:$0xff]
    %v63 = vld [vmem:[#allocation3 + $0x60] sm:$0xff]
    %v64 = vld [vmem:[#allocation3 + $0x68] sm:$0xff]
    %v65 = vld [vmem:[#allocation3 + $0x70] sm:$0xff]
    %v66 = vld [vmem:[#allocation3 + $0x78] sm:$0xff]
    %v67 = vld [vmem:[#allocation3 + $0x80] sm:$0xff]
    %v68 = vld [vmem:[#allocation3 + $0x88] sm:$0xff]
    %v69 = vld [vmem:[#allocation3 + $0x90] sm:$0xff]
    %v70 = vld [vmem:[#allocation3 + $0x98] sm:$0xff]
    %vm71 = vcmask 326656
    %v73 = vsel %vm71, %v43, 0
    %v76 = vsel %vm71, %v44, 0
    %v79 = vsel %vm71, %v45, 0
    %v82 = vsel %vm71, %v46, 0
    %v85 = vsel %vm71, %v47, 0
    %v88 = vsel %vm71, %v48, 0
    %v91 = vsel %vm71, %v49, 0
    %v94 = vsel %vm71, %v50, 0
    %96 = vmatprep.subr.mxu0 %v52
    %97 = vmatpush1.msra.mxu0 %v51
    %98 = vmatprep.subr.mxu0 %v56
    %99 = vmatpush1.msra.mxu0 %v55
    %100 = vmatprep.subr.mxu0 %v60
    %101 = vmatpush1.msra.mxu0 %v59
    %102 = vmatprep.subr.mxu0 %v64
    %103 = vmatpush1.msra.mxu0 %v63
    %104 = vmatprep.subr.mxu0 %v68
    %105 = vmatpush1.msra.mxu0 %v67
    %106 = vmatprep.subr.mxu0 0.0
    %107 = vmatpush1.msra.mxu0 0.0
    %108 = vmatprep.subr.mxu0 0.0
    %109 = vmatpush1.msra.mxu0 0.0
    %110 = vmatprep.subr.mxu0 0.0
    %111 = vmatpush1.msra.mxu0 0.0
    %112 = vmatprep.subr.mxu0 0.0
    %113 = vmatpush1.msra.mxu0 0.0
    %114 = vmatprep.subr.mxu0 0.0
    %115 = vmatpush1.msra.mxu0 0.0
    %116 = vmatprep.subr.mxu0 0.0
    %117 = vmatpush1.msra.mxu0 0.0
    %118 = vmatprep.subr.mxu0 0.0
    %119 = vmatpush1.msra.mxu0 0.0
    %120 = vmatprep.subr.mxu0 0.0
    %121 = vmatpush1.msra.mxu0 0.0
    %122 = vmatprep.subr.mxu0 0.0
    %123 = vmatpush1.msra.mxu0 0.0
    %124 = vmatprep.subr.mxu0 0.0
    %125 = vmatpush1.msra.mxu0 0.0
    %126 = vmatprep.subr.mxu0 0.0
    %127 = vmatpush1.msra.mxu0 0.0
    %128 = vmatprep.subr.mxu0 0.0
    %129 = vmatpush1.msra.mxu0 0.0
    %130 = vmatprep.subr.mxu0 0.0
    %131 = vmatpush1.msra.mxu0 0.0
    %132 = vmatprep.subr.mxu0 0.0
    %133 = vmatpush1.msra.mxu0 0.0
    %134 = vmatprep.subr.mxu0 0.0
    %135 = vmatpush1.msra.mxu0 0.0
    %136 = vmatprep.subr.mxu0 0.0
    %137 = vmatpush1.msra.mxu0 0.0
    %138 = vmatprep.subr.mxu0 0.0
    %139 = vmatpush1.msra.mxu0 0.0
    %140 = vmatprep.subr.mxu0 0.0
    %141 = vmatpush1.msra.mxu0 0.0
    %142 = vmatprep.subr.mxu0 0.0
    %143 = vmatpush1.msra.mxu0 0.0
    %144 = vmatprep.subr.mxu0 0.0
    %145 = vmatpush1.msra.mxu0 0.0
    %146 = vmatprep.subr.mxu0 0.0
    %147 = vmatpush1.msra.mxu0 0.0
    %148 = vmatprep.subr.mxu0 0.0
    %149 = vmatpush1.msra.mxu0 0.0
    %150 = vmatprep.subr.mxu0 0.0
    %151 = vmatpush1.msra.mxu0 0.0
    %152 = vmatprep.subr.mxu0 0.0
    %153 = vmatpush1.msra.mxu0 0.0
    %154 = vmatprep.subr.mxu0 0.0
    %155 = vmatpush1.msra.mxu0 0.0
    %156 = vmatprep.subr.mxu0 0.0
    %157 = vmatpush1.msra.mxu0 0.0
    %158 = vmatprep.subr.mxu0 0.0
    %159 = vmatpush1.msra.mxu0 0.0
    %160 = vmatprep.mubr.f32.mxu0 0.0
    %161 = vmatmul.mubr.f32.gmra.mrb[0].mxu0 %v73
    %v162 = vpop.f32.mrb[0].mxu0
    %v163 = vadd.f32 0.0, %v162
    %v164 = vpop.f32.mrb[0].mxu0
    %v165 = vadd.f32 0.0, %v164
    %166 = vmatprep.mubr.f32.mxu0 0.0
    %167 = vmatmul.mubr.f32.gmra.mrb[0].mxu0 %v76
    %v168 = vpop.f32.mrb[0].mxu0
    %v169 = vadd.f32 0.0, %v168
    %v170 = vpop.f32.mrb[0].mxu0
    %v171 = vadd.f32 0.0, %v170
    %172 = vmatprep.mubr.f32.mxu0 0.0
    %173 = vmatmul.mubr.f32.gmra.mrb[0].mxu0 %v79
    %v174 = vpop.f32.mrb[0].mxu0
    %v175 = vadd.f32 0.0, %v174
    %v176 = vpop.f32.mrb[0].mxu0
    %v177 = vadd.f32 0.0, %v176
    %178 = vmatprep.mubr.f32.mxu0 0.0
    %179 = vmatmul.mubr.f32.gmra.mrb[0].mxu0 %v82
    %v180 = vpop.f32.mrb[0].mxu0
    %v181 = vadd.f32 0.0, %v180
    %v182 = vpop.f32.mrb[0].mxu0
    %v183 = vadd.f32 0.0, %v182
    %184 = vmatprep.mubr.f32.mxu0 0.0
    %185 = vmatmul.mubr.f32.gmra.mrb[0].mxu0 %v85
    %v186 = vpop.f32.mrb[0].mxu0
    %v187 = vadd.f32 0.0, %v186
    %v188 = vpop.f32.mrb[0].mxu0
    %v189 = vadd.f32 0.0, %v188
    %190 = vmatprep.mubr.f32.mxu0 0.0
    %191 = vmatmul.mubr.f32.gmra.mrb[0].mxu0 %v88
    %v192 = vpop.f32.mrb[0].mxu0
    %v193 = vadd.f32 0.0, %v192
    %v194 = vpop.f32.mrb[0].mxu0
    %v195 = vadd.f32 0.0, %v194
    %196 = vmatprep.mubr.f32.mxu0 0.0
    %197 = vmatmul.mubr.f32.gmra.mrb[0].mxu0 %v91
    %v198 = vpop.f32.mrb[0].mxu0
    %v199 = vadd.f32 0.0, %v198
    %v200 = vpop.f32.mrb[0].mxu0
    %v201 = vadd.f32 0.0, %v200
    %202 = vmatprep.mubr.f32.mxu0 0.0
    %203 = vmatmul.mubr.f32.gmra.mrb[0].mxu0 %v94
    %v204 = vpop.f32.mrb[0].mxu0
    %v205 = vadd.f32 0.0, %v204
    %v206 = vpop.f32.mrb[0].mxu0
    %v207 = vadd.f32 0.0, %v206
    %208 = vdwg.mxu0
    %209 = vmatprep.subr.mxu0 %v54
    %210 = vmatpush1.msra.mxu0 %v53
    %211 = vmatprep.subr.mxu0 %v58
    %212 = vmatpush1.msra.mxu0 %v57
    %213 = vmatprep.subr.mxu0 %v62
    %214 = vmatpush1.msra.mxu0 %v61
    %215 = vmatprep.subr.mxu0 %v66
    %216 = vmatpush1.msra.mxu0 %v65
    %217 = vmatprep.subr.mxu0 %v70
    %218 = vmatpush1.msra.mxu0 %v69
    %219 = vmatprep.subr.mxu0 0.0
    %220 = vmatpush1.msra.mxu0 0.0
    %221 = vmatprep.subr.mxu0 0.0
    %222 = vmatpush1.msra.mxu0 0.0
    %223 = vmatprep.subr.mxu0 0.0
    %224 = vmatpush1.msra.mxu0 0.0
    %225 = vmatprep.subr.mxu0 0.0
    %226 = vmatpush1.msra.mxu0 0.0
    %227 = vmatprep.subr.mxu0 0.0
    %228 = vmatpush1.msra.mxu0 0.0
    %229 = vmatprep.subr.mxu0 0.0
    %230 = vmatpush1.msra.mxu0 0.0
    %231 = vmatprep.subr.mxu0 0.0
    %232 = vmatpush1.msra.mxu0 0.0
    %233 = vmatprep.subr.mxu0 0.0
    %234 = vmatpush1.msra.mxu0 0.0
    %235 = vmatprep.subr.mxu0 0.0
    %236 = vmatpush1.msra.mxu0 0.0
    %237 = vmatprep.subr.mxu0 0.0
    %238 = vmatpush1.msra.mxu0 0.0
    %239 = vmatprep.subr.mxu0 0.0
    %240 = vmatpush1.msra.mxu0 0.0
    %241 = vmatprep.subr.mxu0 0.0
    %242 = vmatpush1.msra.mxu0 0.0
    %243 = vmatprep.subr.mxu0 0.0
    %244 = vmatpush1.msra.mxu0 0.0
    %245 = vmatprep.subr.mxu0 0.0
    %246 = vmatpush1.msra.mxu0 0.0
    %247 = vmatprep.subr.mxu0 0.0
    %248 = vmatpush1.msra.mxu0 0.0
    %249 = vmatprep.subr.mxu0 0.0
    %250 = vmatpush1.msra.mxu0 0.0
    %251 = vmatprep.subr.mxu0 0.0
    %252 = vmatpush1.msra.mxu0 0.0
    %253 = vmatprep.subr.mxu0 0.0
    %254 = vmatpush1.msra.mxu0 0.0
    %255 = vmatprep.subr.mxu0 0.0
    %256 = vmatpush1.msra.mxu0 0.0
    %257 = vmatprep.subr.mxu0 0.0
    %258 = vmatpush1.msra.mxu0 0.0
    %259 = vmatprep.subr.mxu0 0.0
    %260 = vmatpush1.msra.mxu0 0.0
    %261 = vmatprep.subr.mxu0 0.0
    %262 = vmatpush1.msra.mxu0 0.0
    %263 = vmatprep.subr.mxu0 0.0
    %264 = vmatpush1.msra.mxu0 0.0
    %265 = vmatprep.subr.mxu0 0.0
    %266 = vmatpush1.msra.mxu0 0.0
    %267 = vmatprep.subr.mxu0 0.0
    %268 = vmatpush1.msra.mxu0 0.0
    %269 = vmatprep.subr.mxu0 0.0
    %270 = vmatpush1.msra.mxu0 0.0
    %271 = vmatprep.subr.mxu0 0.0
    %272 = vmatpush1.msra.mxu0 0.0
    %273 = vmatprep.mubr.f32.mxu0 0.0
    %274 = vmatmul.mubr.f32.gmra.mrb[0].mxu0 %v73
    %v275 = vpop.f32.mrb[0].mxu0
    %v276 = vadd.f32 0.0, %v275
    %v277 = vpop.f32.mrb[0].mxu0
    %v278 = vadd.f32 0.0, %v277
    %279 = vmatprep.mubr.f32.mxu0 0.0
    %280 = vmatmul.mubr.f32.gmra.mrb[0].mxu0 %v76
    %v281 = vpop.f32.mrb[0].mxu0
    %v282 = vadd.f32 0.0, %v281
    %v283 = vpop.f32.mrb[0].mxu0
    %v284 = vadd.f32 0.0, %v283
    %285 = vmatprep.mubr.f32.mxu0 0.0
    %286 = vmatmul.mubr.f32.gmra.mrb[0].mxu0 %v79
    %v287 = vpop.f32.mrb[0].mxu0
    %v288 = vadd.f32 0.0, %v287
    %v289 = vpop.f32.mrb[0].mxu0
    %v290 = vadd.f32 0.0, %v289
    %291 = vmatprep.mubr.f32.mxu0 0.0
    %292 = vmatmul.mubr.f32.gmra.mrb[0].mxu0 %v82
    %v293 = vpop.f32.mrb[0].mxu0
    %v294 = vadd.f32 0.0, %v293
    %v295 = vpop.f32.mrb[0].mxu0
    %v296 = vadd.f32 0.0, %v295
    %297 = vmatprep.mubr.f32.mxu0 0.0
    %298 = vmatmul.mubr.f32.gmra.mrb[0].mxu0 %v85
    %v299 = vpop.f32.mrb[0].mxu0
    %v300 = vadd.f32 0.0, %v299
    %v301 = vpop.f32.mrb[0].mxu0
    %v302 = vadd.f32 0.0, %v301
    %303 = vmatprep.mubr.f32.mxu0 0.0
    %304 = vmatmul.mubr.f32.gmra.mrb[0].mxu0 %v88
    %v305 = vpop.f32.mrb[0].mxu0
    %v306 = vadd.f32 0.0, %v305
    %v307 = vpop.f32.mrb[0].mxu0
    %v308 = vadd.f32 0.0, %v307
    %309 = vmatprep.mubr.f32.mxu0 0.0
    %310 = vmatmul.mubr.f32.gmra.mrb[0].mxu0 %v91
    %v311 = vpop.f32.mrb[0].mxu0
    %v312 = vadd.f32 0.0, %v311
    %v313 = vpop.f32.mrb[0].mxu0
    %v314 = vadd.f32 0.0, %v313
    %315 = vmatprep.mubr.f32.mxu0 0.0
    %316 = vmatmul.mubr.f32.gmra.mrb[0].mxu0 %v94
    %v317 = vpop.f32.mrb[0].mxu0
    %v318 = vadd.f32 0.0, %v317
    %v319 = vpop.f32.mrb[0].mxu0
    %v320 = vadd.f32 0.0, %v319
    %321 = vdwg.mxu0
    %322 = vst [vmem:[#allocation2] sm:$0xff] %v163
    %323 = vst [vmem:[#allocation2 + $0x8] sm:$0xff] %v165
    %324 = vst [vmem:[#allocation2 + $0x10] sm:$0xff] %v276
    %325 = vst [vmem:[#allocation2 + $0x18] sm:$0xff] %v278
    %326 = vst [vmem:[#allocation2 + $0x20] sm:$0xff] %v169
    %327 = vst [vmem:[#allocation2 + $0x28] sm:$0xff] %v171
    %328 = vst [vmem:[#allocation2 + $0x30] sm:$0xff] %v282
    %329 = vst [vmem:[#allocation2 + $0x38] sm:$0xff] %v284
    %330 = vst [vmem:[#allocation2 + $0x40] sm:$0xff] %v175
    %331 = vst [vmem:[#allocation2 + $0x48] sm:$0xff] %v177
    %332 = vst [vmem:[#allocation2 + $0x50] sm:$0xff] %v288
    %333 = vst [vmem:[#allocation2 + $0x58] sm:$0xff] %v290
    %334 = vst [vmem:[#allocation2 + $0x60] sm:$0xff] %v181
    %335 = vst [vmem:[#allocation2 + $0x68] sm:$0xff] %v183
    %336 = vst [vmem:[#allocation2 + $0x70] sm:$0xff] %v294
    %337 = vst [vmem:[#allocation2 + $0x78] sm:$0xff] %v296
    %338 = vst [vmem:[#allocation2 + $0x80] sm:$0xff] %v187
    %339 = vst [vmem:[#allocation2 + $0x88] sm:$0xff] %v189
    %340 = vst [vmem:[#allocation2 + $0x90] sm:$0xff] %v300
    %341 = vst [vmem:[#allocation2 + $0x98] sm:$0xff] %v302
    %342 = vst [vmem:[#allocation2 + $0xa0] sm:$0xff] %v193
    %343 = vst [vmem:[#allocation2 + $0xa8] sm:$0xff] %v195
    %344 = vst [vmem:[#allocation2 + $0xb0] sm:$0xff] %v306
    %345 = vst [vmem:[#allocation2 + $0xb8] sm:$0xff] %v308
    %346 = vst [vmem:[#allocation2 + $0xc0] sm:$0xff] %v199
    %347 = vst [vmem:[#allocation2 + $0xc8] sm:$0xff] %v201
    %348 = vst [vmem:[#allocation2 + $0xd0] sm:$0xff] %v312
    %349 = vst [vmem:[#allocation2 + $0xd8] sm:$0xff] %v314
    %350 = vst [vmem:[#allocation2 + $0xe0] sm:$0xff] %v205
    %351 = vst [vmem:[#allocation2 + $0xe8] sm:$0xff] %v207
    %352 = vst [vmem:[#allocation2 + $0xf0] sm:$0xff] %v318
    %353 = vst [vmem:[#allocation2 + $0xf8] sm:$0xff] %v320
    %v354 = vld [vmem:[#allocation6] sm:$0xff]
    %v355 = vld [vmem:[#allocation6 + $0x8] sm:$0xff]
    %v356 = vld [vmem:[#allocation6 + $0x10] sm:$0xff]
    %v357 = vld [vmem:[#allocation6 + $0x18] sm:$0xff]
    %v358 = vld [vmem:[#allocation6 + $0x20] sm:$0xff]
    %v359 = vld [vmem:[#allocation6 + $0x28] sm:$0xff]
    %v360 = vld [vmem:[#allocation6 + $0x30] sm:$0xff]
    %v361 = vld [vmem:[#allocation6 + $0x38] sm:$0xff]
    %v362 = vld [vmem:[#allocation6 + $0x40] sm:$0xff]
    %v363 = vld [vmem:[#allocation6 + $0x48] sm:$0xff]
    %v364 = vld [vmem:[#allocation6 + $0x50] sm:$0xff]
    %v365 = vld [vmem:[#allocation6 + $0x58] sm:$0xff]
    %v366 = vld [vmem:[#allocation6 + $0x60] sm:$0xff]
    %v367 = vld [vmem:[#allocation6 + $0x68] sm:$0xff]
    %v368 = vld [vmem:[#allocation6 + $0x70] sm:$0xff]
    %v369 = vld [vmem:[#allocation6 + $0x78] sm:$0xff]
    %v370 = vld [vmem:[#allocation6 + $0x80] sm:$0xff]
    %v371 = vld [vmem:[#allocation6 + $0x88] sm:$0xff]
    %v372 = vld [vmem:[#allocation6 + $0x90] sm:$0xff]
    %v373 = vld [vmem:[#allocation6 + $0x98] sm:$0xff]
    %v374 = vld [vmem:[#allocation6 + $0xa0] sm:$0xff]
    %v375 = vld [vmem:[#allocation6 + $0xa8] sm:$0xff]
    %v376 = vld [vmem:[#allocation6 + $0xb0] sm:$0xff]
    %v377 = vld [vmem:[#allocation6 + $0xb8] sm:$0xff]
    %v378 = vld [vmem:[#allocation6 + $0xc0] sm:$0xff]
    %v379 = vld [vmem:[#allocation6 + $0xc8] sm:$0xff]
    %v380 = vld [vmem:[#allocation6 + $0xd0] sm:$0xff]
    %v381 = vld [vmem:[#allocation6 + $0xd8] sm:$0xff]
    %v382 = vld [vmem:[#allocation6 + $0xe0] sm:$0xff]
    %v383 = vld [vmem:[#allocation6 + $0xe8] sm:$0xff]
    %v384 = vld [vmem:[#allocation6 + $0xf0] sm:$0xff]
    %v385 = vld [vmem:[#allocation6 + $0xf8] sm:$0xff]
    %v386 = vld [vmem:[#allocation6 + $0x100] sm:$0xff]
    %v387 = vld [vmem:[#allocation6 + $0x108] sm:$0xff]
    %v388 = vld [vmem:[#allocation6 + $0x110] sm:$0xff]
    %v389 = vld [vmem:[#allocation6 + $0x118] sm:$0xff]
    %v390 = vld [vmem:[#allocation6 + $0x120] sm:$0xff]
    %v391 = vld [vmem:[#allocation6 + $0x128] sm:$0xff]
    %v392 = vld [vmem:[#allocation6 + $0x130] sm:$0xff]
    %v393 = vld [vmem:[#allocation6 + $0x138] sm:$0xff]
    %v394 = vld [vmem:[#allocation6 + $0x140] sm:$0xff]
    %v395 = vld [vmem:[#allocation6 + $0x148] sm:$0xff]
    %v396 = vld [vmem:[#allocation6 + $0x150] sm:$0xff]
    %v397 = vld [vmem:[#allocation6 + $0x158] sm:$0xff]
    %v398 = vld [vmem:[#allocation6 + $0x160] sm:$0xff]
    %v399 = vld [vmem:[#allocation6 + $0x168] sm:$0xff]
    %v400 = vld [vmem:[#allocation6 + $0x170] sm:$0xff]
    %v401 = vld [vmem:[#allocation6 + $0x178] sm:$0xff]
    %v402 = vld [vmem:[#allocation6 + $0x180] sm:$0xff]
    %v403 = vld [vmem:[#allocation6 + $0x188] sm:$0xff]
    %v404 = vld [vmem:[#allocation6 + $0x190] sm:$0xff]
    %v405 = vld [vmem:[#allocation6 + $0x198] sm:$0xff]
    %v406 = vld [vmem:[#allocation6 + $0x1a0] sm:$0xff]
    %v407 = vld [vmem:[#allocation6 + $0x1a8] sm:$0xff]
    %v408 = vld [vmem:[#allocation6 + $0x1b0] sm:$0xff]
    %v409 = vld [vmem:[#allocation6 + $0x1b8] sm:$0xff]
    %v410 = vld [vmem:[#allocation6 + $0x1c0] sm:$0xff]
    %v411 = vld [vmem:[#allocation6 + $0x1c8] sm:$0xff]
    %v412 = vld [vmem:[#allocation6 + $0x1d0] sm:$0xff]
    %v413 = vld [vmem:[#allocation6 + $0x1d8] sm:$0xff]
    %v414 = vld [vmem:[#allocation6 + $0x1e0] sm:$0xff]
    %v415 = vld [vmem:[#allocation6 + $0x1e8] sm:$0xff]
    %v416 = vld [vmem:[#allocation6 + $0x1f0] sm:$0xff]
    %v417 = vld [vmem:[#allocation6 + $0x1f8] sm:$0xff]
    %v418 = vld [vmem:[#allocation2] sm:$0xff]
    %v419 = vld [vmem:[#allocation2 + $0x8] sm:$0xff]
    %v420 = vld [vmem:[#allocation2 + $0x10] sm:$0xff]
    %v421 = vld [vmem:[#allocation2 + $0x18] sm:$0xff]
    %422 = vmatprep.subr.mxu0 %v355
    %423 = vmatpush1.msra.mxu0 %v354
    %424 = vmatprep.subr.mxu0 %v359
    %425 = vmatpush1.msra.mxu0 %v358
    %426 = vmatprep.subr.mxu0 %v363
    %427 = vmatpush1.msra.mxu0 %v362
    %428 = vmatprep.subr.mxu0 %v367
    %429 = vmatpush1.msra.mxu0 %v366
    %430 = vmatprep.subr.mxu0 %v371
    %431 = vmatpush1.msra.mxu0 %v370
    %432 = vmatprep.subr.mxu0 %v375
    %433 = vmatpush1.msra.mxu0 %v374
    %434 = vmatprep.subr.mxu0 %v379
    %435 = vmatpush1.msra.mxu0 %v378
    %436 = vmatprep.subr.mxu0 %v383
    %437 = vmatpush1.msra.mxu0 %v382
    %438 = vmatprep.subr.mxu0 %v387
    %439 = vmatpush1.msra.mxu0 %v386
    %440 = vmatprep.subr.mxu0 %v391
    %441 = vmatpush1.msra.mxu0 %v390
    %442 = vmatprep.subr.mxu0 %v395
    %443 = vmatpush1.msra.mxu0 %v394
    %444 = vmatprep.subr.mxu0 %v399
    %445 = vmatpush1.msra.mxu0 %v398
    %446 = vmatprep.subr.mxu0 %v403
    %447 = vmatpush1.msra.mxu0 %v402
    %448 = vmatprep.subr.mxu0 %v407
    %449 = vmatpush1.msra.mxu0 %v406
    %450 = vmatprep.subr.mxu0 %v411
    %451 = vmatpush1.msra.mxu0 %v410
    %452 = vmatprep.subr.mxu0 %v415
    %453 = vmatpush1.msra.mxu0 %v414
    %454 = vmatprep.subr.mxu0 0.0
    %455 = vmatpush1.msra.mxu0 0.0
    %456 = vmatprep.subr.mxu0 0.0
    %457 = vmatpush1.msra.mxu0 0.0
    %458 = vmatprep.subr.mxu0 0.0
    %459 = vmatpush1.msra.mxu0 0.0
    %460 = vmatprep.subr.mxu0 0.0
    %461 = vmatpush1.msra.mxu0 0.0
    %462 = vmatprep.subr.mxu0 0.0
    %463 = vmatpush1.msra.mxu0 0.0
    %464 = vmatprep.subr.mxu0 0.0
    %465 = vmatpush1.msra.mxu0 0.0
    %466 = vmatprep.subr.mxu0 0.0
    %467 = vmatpush1.msra.mxu0 0.0
    %468 = vmatprep.subr.mxu0 0.0
    %469 = vmatpush1.msra.mxu0 0.0
    %470 = vmatprep.subr.mxu0 0.0
    %471 = vmatpush1.msra.mxu0 0.0
    %472 = vmatprep.subr.mxu0 0.0
    %473 = vmatpush1.msra.mxu0 0.0
    %474 = vmatprep.subr.mxu0 0.0
    %475 = vmatpush1.msra.mxu0 0.0
    %476 = vmatprep.subr.mxu0 0.0
    %477 = vmatpush1.msra.mxu0 0.0
    %478 = vmatprep.subr.mxu0 0.0
    %479 = vmatpush1.msra.mxu0 0.0
    %480 = vmatprep.subr.mxu0 0.0
    %481 = vmatpush1.msra.mxu0 0.0
    %482 = vmatprep.subr.mxu0 0.0
    %483 = vmatpush1.msra.mxu0 0.0
    %484 = vmatprep.subr.mxu0 0.0
    %485 = vmatpush1.msra.mxu0 0.0
    %486 = vmatprep.mubr.f32.mxu0 0.0
    %487 = vmatmul.mubr.f32.gmra.mrb[0].mxu0 0.0
    %v488 = vpop.f32.mrb[0].mxu0
    %v489 = vadd.f32 0.0, %v488
    %v490 = vpop.f32.mrb[0].mxu0
    %v491 = vadd.f32 0.0, %v490
    %492 = vdwg.mxu0
    %493 = vmatprep.subr.mxu0 %v357
    %494 = vmatpush1.msra.mxu0 %v356
    %495 = vmatprep.subr.mxu0 %v361
    %496 = vmatpush1.msra.mxu0 %v360
    %497 = vmatprep.subr.mxu0 %v365
    %498 = vmatpush1.msra.mxu0 %v364
    %499 = vmatprep.subr.mxu0 %v369
    %500 = vmatpush1.msra.mxu0 %v368
    %501 = vmatprep.subr.mxu0 %v373
    %502 = vmatpush1.msra.mxu0 %v372
    %503 = vmatprep.subr.mxu0 %v377
    %504 = vmatpush1.msra.mxu0 %v376
    %505 = vmatprep.subr.mxu0 %v381
    %506 = vmatpush1.msra.mxu0 %v380
    %507 = vmatprep.subr.mxu0 %v385
    %508 = vmatpush1.msra.mxu0 %v384
    %509 = vmatprep.subr.mxu0 %v389
    %510 = vmatpush1.msra.mxu0 %v388
    %511 = vmatprep.subr.mxu0 %v393
    %512 = vmatpush1.msra.mxu0 %v392
    %513 = vmatprep.subr.mxu0 %v397
    %514 = vmatpush1.msra.mxu0 %v396
    %515 = vmatprep.subr.mxu0 %v401
    %516 = vmatpush1.msra.mxu0 %v400
    %517 = vmatprep.subr.mxu0 %v405
    %518 = vmatpush1.msra.mxu0 %v404
    %519 = vmatprep.subr.mxu0 %v409
    %520 = vmatpush1.msra.mxu0 %v408
    %521 = vmatprep.subr.mxu0 %v413
    %522 = vmatpush1.msra.mxu0 %v412
    %523 = vmatprep.subr.mxu0 %v417
    %524 = vmatpush1.msra.mxu0 %v416
    %525 = vmatprep.subr.mxu0 0.0
    %526 = vmatpush1.msra.mxu0 0.0
    %527 = vmatprep.subr.mxu0 0.0
    %528 = vmatpush1.msra.mxu0 0.0
    %529 = vmatprep.subr.mxu0 0.0
    %530 = vmatpush1.msra.mxu0 0.0
    %531 = vmatprep.subr.mxu0 0.0
    %532 = vmatpush1.msra.mxu0 0.0
    %533 = vmatprep.subr.mxu0 0.0
    %534 = vmatpush1.msra.mxu0 0.0
    %535 = vmatprep.subr.mxu0 0.0
    %536 = vmatpush1.msra.mxu0 0.0
    %537 = vmatprep.subr.mxu0 0.0
    %538 = vmatpush1.msra.mxu0 0.0
    %539 = vmatprep.subr.mxu0 0.0
    %540 = vmatpush1.msra.mxu0 0.0
    %541 = vmatprep.subr.mxu0 0.0
    %542 = vmatpush1.msra.mxu0 0.0
    %543 = vmatprep.subr.mxu0 0.0
    %544 = vmatpush1.msra.mxu0 0.0
    %545 = vmatprep.subr.mxu0 0.0
    %546 = vmatpush1.msra.mxu0 0.0
    %547 = vmatprep.subr.mxu0 0.0
    %548 = vmatpush1.msra.mxu0 0.0
    %549 = vmatprep.subr.mxu0 0.0
    %550 = vmatpush1.msra.mxu0 0.0
    %551 = vmatprep.subr.mxu0 0.0
    %552 = vmatpush1.msra.mxu0 0.0
    %553 = vmatprep.subr.mxu0 0.0
    %554 = vmatpush1.msra.mxu0 0.0
    %555 = vmatprep.subr.mxu0 0.0
    %556 = vmatpush1.msra.mxu0 0.0
    %557 = vmatprep.mubr.f32.mxu0 0.0
    %558 = vmatmul.mubr.f32.gmra.mrb[0].mxu0 0.0
    %v559 = vpop.f32.mrb[0].mxu0
    %v560 = vadd.f32 0.0, %v559
    %v561 = vpop.f32.mrb[0].mxu0
    %v562 = vadd.f32 0.0, %v561
    %563 = vdwg.mxu0
    %v564 = vadd.f32 %v418, %v489
    %v565 = vadd.f32 %v419, %v491
    %v566 = vadd.f32 %v420, %v560
    %v567 = vadd.f32 %v421, %v562
    %v568 = vxor.u32 %v564, 2147483648
    %v569 = vxor.u32 %v565, 2147483648
    %v570 = vxor.u32 %v566, 2147483648
    %v571 = vmul.f32 %v568, 1.442695
    %v572 = vpow.pop %v571
    %v573 = vmul.f32 %v569, 1.442695
    %v574 = vpow.pop %v573
    %v575 = vmul.f32 %v570, 1.442695
    %v576 = vpow.pop %v575
    %v577 = vadd.f32 %v572, 1.0
    %v578 = vadd.f32 %v574, 1.0
    %v579 = vadd.f32 %v576, 1.0
    %v580 = vrcp.pop %v577
    %v581 = vmul.f32 1.0, %v580
    %v582 = vrcp.pop %v578
    %v583 = vmul.f32 1.0, %v582
    %v584 = vrcp.pop %v579
    %v585 = vmul.f32 1.0, %v584
    %v586 = vtanh.pop %v567
    %v587 = vmul.f32 %v583, 0.0
    %v588 = vmul.f32 %v581, %v586
    %v589 = vadd.f32 %v587, %v588
    %v590 = vtanh.pop %v589
    %v591 = vmul.f32 %v585, %v590
    %592 = vrot.lane.b32.xlu0 %v591, 64
    %v593 = vpop.permute.xlu0 %592
    %v594 = vmul.f32 %v591, %v593
    %595 = vst [vmem:[#allocation8] sm:$0xff] %v594
    %s596 = scalar_lea.vmem [#allocation2], 32
    %v597 = vld [vmem:[%s596] sm:$0xff]
    %v598 = vld [vmem:[%s596 + $0x8] sm:$0xff]
    %v599 = vld [vmem:[%s596 + $0x10] sm:$0xff]
    %v600 = vld [vmem:[%s596 + $0x18] sm:$0xff]
    %601 = vmatprep.subr.mxu0 %v355
    %602 = vmatpush1.msra.mxu0 %v354
    %603 = vmatprep.subr.mxu0 %v359
    %604 = vmatpush1.msra.mxu0 %v358
    %605 = vmatprep.subr.mxu0 %v363
    %606 = vmatpush1.msra.mxu0 %v362
    %607 = vmatprep.subr.mxu0 %v367
    %608 = vmatpush1.msra.mxu0 %v366
    %609 = vmatprep.subr.mxu0 %v371
    %610 = vmatpush1.msra.mxu0 %v370
    %611 = vmatprep.subr.mxu0 %v375
    %612 = vmatpush1.msra.mxu0 %v374
    %613 = vmatprep.subr.mxu0 %v379
    %614 = vmatpush1.msra.mxu0 %v378
    %615 = vmatprep.subr.mxu0 %v383
    %616 = vmatpush1.msra.mxu0 %v382
    %617 = vmatprep.subr.mxu0 %v387
    %618 = vmatpush1.msra.mxu0 %v386
    %619 = vmatprep.subr.mxu0 %v391
    %620 = vmatpush1.msra.mxu0 %v390
    %621 = vmatprep.subr.mxu0 %v395
    %622 = vmatpush1.msra.mxu0 %v394
    %623 = vmatprep.subr.mxu0 %v399
    %624 = vmatpush1.msra.mxu0 %v398
    %625 = vmatprep.subr.mxu0 %v403
    %626 = vmatpush1.msra.mxu0 %v402
    %627 = vmatprep.subr.mxu0 %v407
    %628 = vmatpush1.msra.mxu0 %v406
    %629 = vmatprep.subr.mxu0 %v411
    %630 = vmatpush1.msra.mxu0 %v410
    %631 = vmatprep.subr.mxu0 %v415
    %632 = vmatpush1.msra.mxu0 %v414
    %633 = vmatprep.subr.mxu0 0.0
    %634 = vmatpush1.msra.mxu0 0.0
    %635 = vmatprep.subr.mxu0 0.0
    %636 = vmatpush1.msra.mxu0 0.0
    %637 = vmatprep.subr.mxu0 0.0
    %638 = vmatpush1.msra.mxu0 0.0
    %639 = vmatprep.subr.mxu0 0.0
    %640 = vmatpush1.msra.mxu0 0.0
    %641 = vmatprep.subr.mxu0 0.0
    %642 = vmatpush1.msra.mxu0 0.0
    %643 = vmatprep.subr.mxu0 0.0
    %644 = vmatpush1.msra.mxu0 0.0
    %645 = vmatprep.subr.mxu0 0.0
    %646 = vmatpush1.msra.mxu0 0.0
    %647 = vmatprep.subr.mxu0 0.0
    %648 = vmatpush1.msra.mxu0 0.0
    %649 = vmatprep.subr.mxu0 0.0
    %650 = vmatpush1.msra.mxu0 0.0
    %651 = vmatprep.subr.mxu0 0.0
    %652 = vmatpush1.msra.mxu0 0.0
    %653 = vmatprep.subr.mxu0 0.0
    %654 = vmatpush1.msra.mxu0 0.0
    %655 = vmatprep.subr.mxu0 0.0
    %656 = vmatpush1.msra.mxu0 0.0
    %657 = vmatprep.subr.mxu0 0.0
    %658 = vmatpush1.msra.mxu0 0.0
    %659 = vmatprep.subr.mxu0 0.0
    %660 = vmatpush1.msra.mxu0 0.0
    %661 = vmatprep.subr.mxu0 0.0
    %662 = vmatpush1.msra.mxu0 0.0
    %663 = vmatprep.subr.mxu0 0.0
    %664 = vmatpush1.msra.mxu0 0.0
    %665 = vmatprep.mubr.f32.mxu0 0.0
    %666 = vmatmul.mubr.f32.gmra.mrb[0].mxu0 %v591
    %v667 = vpop.f32.mrb[0].mxu0
    %v668 = vadd.f32 0.0, %v667
    %v669 = vpop.f32.mrb[0].mxu0
    %v670 = vadd.f32 0.0, %v669
    %671 = vdwg.mxu0
    %672 = vmatprep.subr.mxu0 %v357
    %673 = vmatpush1.msra.mxu0 %v356
    %674 = vmatprep.subr.mxu0 %v361
    %675 = vmatpush1.msra.mxu0 %v360
    %676 = vmatprep.subr.mxu0 %v365
    %677 = vmatpush1.msra.mxu0 %v364
    %678 = vmatprep.subr.mxu0 %v369
    %679 = vmatpush1.msra.mxu0 %v368
    %680 = vmatprep.subr.mxu0 %v373
    %681 = vmatpush1.msra.mxu0 %v372
    %682 = vmatprep.subr.mxu0 %v377
    %683 = vmatpush1.msra.mxu0 %v376
    %684 = vmatprep.subr.mxu0 %v381
    %685 = vmatpush1.msra.mxu0 %v380
    %686 = vmatprep.subr.mxu0 %v385
    %687 = vmatpush1.msra.mxu0 %v384
    %688 = vmatprep.subr.mxu0 %v389
    %689 = vmatpush1.msra.mxu0 %v388
    %690 = vmatprep.subr.mxu0 %v393
    %691 = vmatpush1.msra.mxu0 %v392
    %692 = vmatprep.subr.mxu0 %v397
    %693 = vmatpush1.msra.mxu0 %v396
    %694 = vmatprep.subr.mxu0 %v401
    %695 = vmatpush1.msra.mxu0 %v400
    %696 = vmatprep.subr.mxu0 %v405
    %697 = vmatpush1.msra.mxu0 %v404
    %698 = vmatprep.subr.mxu0 %v409
    %699 = vmatpush1.msra.mxu0 %v408
    %700 = vmatprep.subr.mxu0 %v413
    %701 = vmatpush1.msra.mxu0 %v412
    %702 = vmatprep.subr.mxu0 %v417
    %703 = vmatpush1.msra.mxu0 %v416
    %704 = vmatprep.subr.mxu0 0.0
    %705 = vmatpush1.msra.mxu0 0.0
    %706 = vmatprep.subr.mxu0 0.0
    %707 = vmatpush1.msra.mxu0 0.0
    %708 = vmatprep.subr.mxu0 0.0
    %709 = vmatpush1.msra.mxu0 0.0
    %710 = vmatprep.subr.mxu0 0.0
    %711 = vmatpush1.msra.mxu0 0.0
    %712 = vmatprep.subr.mxu0 0.0
    %713 = vmatpush1.msra.mxu0 0.0
    %714 = vmatprep.subr.mxu0 0.0
    %715 = vmatpush1.msra.mxu0 0.0
    %716 = vmatprep.subr.mxu0 0.0
    %717 = vmatpush1.msra.mxu0 0.0
    %718 = vmatprep.subr.mxu0 0.0
    %719 = vmatpush1.msra.mxu0 0.0
    %720 = vmatprep.subr.mxu0 0.0
    %721 = vmatpush1.msra.mxu0 0.0
    %722 = vmatprep.subr.mxu0 0.0
    %723 = vmatpush1.msra.mxu0 0.0
    %724 = vmatprep.subr.mxu0 0.0
    %725 = vmatpush1.msra.mxu0 0.0
    %726 = vmatprep.subr.mxu0 0.0
    %727 = vmatpush1.msra.mxu0 0.0
    %728 = vmatprep.subr.mxu0 0.0
    %729 = vmatpush1.msra.mxu0 0.0
    %730 = vmatprep.subr.mxu0 0.0
    %731 = vmatpush1.msra.mxu0 0.0
    %732 = vmatprep.subr.mxu0 0.0
    %733 = vmatpush1.msra.mxu0 0.0
    %734 = vmatprep.subr.mxu0 0.0
    %735 = vmatpush1.msra.mxu0 0.0
    %736 = vmatprep.mubr.f32.mxu0 0.0
    %737 = vmatmul.mubr.f32.gmra.mrb[0].mxu0 %v591
    %v738 = vpop.f32.mrb[0].mxu0
    %v739 = vadd.f32 0.0, %v738
    %v740 = vpop.f32.mrb[0].mxu0
    %v741 = vadd.f32 0.0, %v740
    %742 = vdwg.mxu0
    %v743 = vadd.f32 %v597, %v668
    %v744 = vadd.f32 %v598, %v670
    %v745 = vadd.f32 %v599, %v739
    %v746 = vadd.f32 %v600, %v741
    %v747 = vxor.u32 %v743, 2147483648
    %v748 = vxor.u32 %v744, 2147483648
    %v749 = vxor.u32 %v745, 2147483648
    %v750 = vmul.f32 %v747, 1.442695
    %v751 = vpow.pop %v750
    %v752 = vmul.f32 %v748, 1.442695
    %v753 = vpow.pop %v752
    %v754 = vmul.f32 %v749, 1.442695
    %v755 = vpow.pop %v754
    %v756 = vadd.f32 %v751, 1.0
    %v757 = vadd.f32 %v753, 1.0
    %v758 = vadd.f32 %v755, 1.0
    %v759 = vrcp.pop %v756
    %v760 = vmul.f32 1.0, %v759
    %v761 = vrcp.pop %v757
    %v762 = vmul.f32 1.0, %v761
    %v763 = vrcp.pop %v758
    %v764 = vmul.f32 1.0, %v763
    %v765 = vtanh.pop %v746
    %v766 = vmul.f32 %v762, %v589
    %v767 = vmul.f32 %v760, %v765
    %v768 = vadd.f32 %v766, %v767
    %v769 = vtanh.pop %v768
    %v770 = vmul.f32 %v764, %v769
    %771 = vrot.lane.b32.xlu0 %v770, 64
    %v772 = vpop.permute.xlu0 %771
    %v773 = vmul.f32 %v770, %v772
    %s774 = scalar_lea.vmem [#allocation8], 8
    %775 = vst [vmem:[%s774] sm:$0xff] %v773
    %s776 = scalar_lea.vmem [#allocation2], 64
    %v777 = vld [vmem:[%s776] sm:$0xff]
    %v778 = vld [vmem:[%s776 + $0x8] sm:$0xff]
    %v779 = vld [vmem:[%s776 + $0x10] sm:$0xff]
    %v780 = vld [vmem:[%s776 + $0x18] sm:$0xff]
    %781 = vmatprep.subr.mxu0 %v355
    %782 = vmatpush1.msra.mxu0 %v354
    %783 = vmatprep.subr.mxu0 %v359
    %784 = vmatpush1.msra.mxu0 %v358
    %785 = vmatprep.subr.mxu0 %v363
    %786 = vmatpush1.msra.mxu0 %v362
    %787 = vmatprep.subr.mxu0 %v367
    %788 = vmatpush1.msra.mxu0 %v366
    %789 = vmatprep.subr.mxu0 %v371
    %790 = vmatpush1.msra.mxu0 %v370
    %791 = vmatprep.subr.mxu0 %v375
    %792 = vmatpush1.msra.mxu0 %v374
    %793 = vmatprep.subr.mxu0 %v379
    %794 = vmatpush1.msra.mxu0 %v378
    %795 = vmatprep.subr.mxu0 %v383
    %796 = vmatpush1.msra.mxu0 %v382
    %797 = vmatprep.subr.mxu0 %v387
    %798 = vmatpush1.msra.mxu0 %v386
    %799 = vmatprep.subr.mxu0 %v391
    %800 = vmatpush1.msra.mxu0 %v390
    %801 = vmatprep.subr.mxu0 %v395
    %802 = vmatpush1.msra.mxu0 %v394
    %803 = vmatprep.subr.mxu0 %v399
    %804 = vmatpush1.msra.mxu0 %v398
    %805 = vmatprep.subr.mxu0 %v403
    %806 = vmatpush1.msra.mxu0 %v402
    %807 = vmatprep.subr.mxu0 %v407
    %808 = vmatpush1.msra.mxu0 %v406
    %809 = vmatprep.subr.mxu0 %v411
    %810 = vmatpush1.msra.mxu0 %v410
    %811 = vmatprep.subr.mxu0 %v415
    %812 = vmatpush1.msra.mxu0 %v414
    %813 = vmatprep.subr.mxu0 0.0
    %814 = vmatpush1.msra.mxu0 0.0
    %815 = vmatprep.subr.mxu0 0.0
    %816 = vmatpush1.msra.mxu0 0.0
    %817 = vmatprep.subr.mxu0 0.0
    %818 = vmatpush1.msra.mxu0 0.0
    %819 = vmatprep.subr.mxu0 0.0
    %820 = vmatpush1.msra.mxu0 0.0
    %821 = vmatprep.subr.mxu0 0.0
    %822 = vmatpush1.msra.mxu0 0.0
    %823 = vmatprep.subr.mxu0 0.0
    %824 = vmatpush1.msra.mxu0 0.0
    %825 = vmatprep.subr.mxu0 0.0
    %826 = vmatpush1.msra.mxu0 0.0
    %827 = vmatprep.subr.mxu0 0.0
    %828 = vmatpush1.msra.mxu0 0.0
    %829 = vmatprep.subr.mxu0 0.0
    %830 = vmatpush1.msra.mxu0 0.0
    %831 = vmatprep.subr.mxu0 0.0
    %832 = vmatpush1.msra.mxu0 0.0
    %833 = vmatprep.subr.mxu0 0.0
    %834 = vmatpush1.msra.mxu0 0.0
    %835 = vmatprep.subr.mxu0 0.0
    %836 = vmatpush1.msra.mxu0 0.0
    %837 = vmatprep.subr.mxu0 0.0
    %838 = vmatpush1.msra.mxu0 0.0
    %839 = vmatprep.subr.mxu0 0.0
    %840 = vmatpush1.msra.mxu0 0.0
    %841 = vmatprep.subr.mxu0 0.0
    %842 = vmatpush1.msra.mxu0 0.0
    %843 = vmatprep.subr.mxu0 0.0
    %844 = vmatpush1.msra.mxu0 0.0
    %845 = vmatprep.mubr.f32.mxu0 0.0
    %846 = vmatmul.mubr.f32.gmra.mrb[0].mxu0 %v770
    %v847 = vpop.f32.mrb[0].mxu0
    %v848 = vadd.f32 0.0, %v847
    %v849 = vpop.f32.mrb[0].mxu0
    %v850 = vadd.f32 0.0, %v849
    %851 = vdwg.mxu0
    %852 = vmatprep.subr.mxu0 %v357
    %853 = vmatpush1.msra.mxu0 %v356
    %854 = vmatprep.subr.mxu0 %v361
    %855 = vmatpush1.msra.mxu0 %v360
    %856 = vmatprep.subr.mxu0 %v365
    %857 = vmatpush1.msra.mxu0 %v364
    %858 = vmatprep.subr.mxu0 %v369
    %859 = vmatpush1.msra.mxu0 %v368
    %860 = vmatprep.subr.mxu0 %v373
    %861 = vmatpush1.msra.mxu0 %v372
    %862 = vmatprep.subr.mxu0 %v377
    %863 = vmatpush1.msra.mxu0 %v376
    %864 = vmatprep.subr.mxu0 %v381
    %865 = vmatpush1.msra.mxu0 %v380
    %866 = vmatprep.subr.mxu0 %v385
    %867 = vmatpush1.msra.mxu0 %v384
    %868 = vmatprep.subr.mxu0 %v389
    %869 = vmatpush1.msra.mxu0 %v388
    %870 = vmatprep.subr.mxu0 %v393
    %871 = vmatpush1.msra.mxu0 %v392
    %872 = vmatprep.subr.mxu0 %v397
    %873 = vmatpush1.msra.mxu0 %v396
    %874 = vmatprep.subr.mxu0 %v401
    %875 = vmatpush1.msra.mxu0 %v400
    %876 = vmatprep.subr.mxu0 %v405
    %877 = vmatpush1.msra.mxu0 %v404
    %878 = vmatprep.subr.mxu0 %v409
    %879 = vmatpush1.msra.mxu0 %v408
    %880 = vmatprep.subr.mxu0 %v413
    %881 = vmatpush1.msra.mxu0 %v412
    %882 = vmatprep.subr.mxu0 %v417
    %883 = vmatpush1.msra.mxu0 %v416
    %884 = vmatprep.subr.mxu0 0.0
    %885 = vmatpush1.msra.mxu0 0.0
    %886 = vmatprep.subr.mxu0 0.0
    %887 = vmatpush1.msra.mxu0 0.0
    %888 = vmatprep.subr.mxu0 0.0
    %889 = vmatpush1.msra.mxu0 0.0
    %890 = vmatprep.subr.mxu0 0.0
    %891 = vmatpush1.msra.mxu0 0.0
    %892 = vmatprep.subr.mxu0 0.0
    %893 = vmatpush1.msra.mxu0 0.0
    %894 = vmatprep.subr.mxu0 0.0
    %895 = vmatpush1.msra.mxu0 0.0
    %896 = vmatprep.subr.mxu0 0.0
    %897 = vmatpush1.msra.mxu0 0.0
    %898 = vmatprep.subr.mxu0 0.0
    %899 = vmatpush1.msra.mxu0 0.0
    %900 = vmatprep.subr.mxu0 0.0
    %901 = vmatpush1.msra.mxu0 0.0
    %902 = vmatprep.subr.mxu0 0.0
    %903 = vmatpush1.msra.mxu0 0.0
    %904 = vmatprep.subr.mxu0 0.0
    %905 = vmatpush1.msra.mxu0 0.0
    %906 = vmatprep.subr.mxu0 0.0
    %907 = vmatpush1.msra.mxu0 0.0
    %908 = vmatprep.subr.mxu0 0.0
    %909 = vmatpush1.msra.mxu0 0.0
    %910 = vmatprep.subr.mxu0 0.0
    %911 = vmatpush1.msra.mxu0 0.0
    %912 = vmatprep.subr.mxu0 0.0
    %913 = vmatpush1.msra.mxu0 0.0
    %914 = vmatprep.subr.mxu0 0.0
    %915 = vmatpush1.msra.mxu0 0.0
    %916 = vmatprep.mubr.f32.mxu0 0.0
    %917 = vmatmul.mubr.f32.gmra.mrb[0].mxu0 %v770
    %v918 = vpop.f32.mrb[0].mxu0
    %v919 = vadd.f32 0.0, %v918
    %v920 = vpop.f32.mrb[0].mxu0
    %v921 = vadd.f32 0.0, %v920
    %922 = vdwg.mxu0
    %v923 = vadd.f32 %v777, %v848
    %v924 = vadd.f32 %v778, %v850
    %v925 = vadd.f32 %v779, %v919
    %v926 = vadd.f32 %v780, %v921
    %v927 = vxor.u32 %v923, 2147483648
    %v928 = vxor.u32 %v924, 2147483648
    %v929 = vxor.u32 %v925, 2147483648
    %v930 = vmul.f32 %v927, 1.442695
    %v931 = vpow.pop %v930
    %v932 = vmul.f32 %v928, 1.442695
    %v933 = vpow.pop %v932
    %v934 = vmul.f32 %v929, 1.442695
    %v935 = vpow.pop %v934
    %v936 = vadd.f32 %v931, 1.0
    %v937 = vadd.f32 %v933, 1.0
    %v938 = vadd.f32 %v935, 1.0
    %v939 = vrcp.pop %v936
    %v940 = vmul.f32 1.0, %v939
    %v941 = vrcp.pop %v937
    %v942 = vmul.f32 1.0, %v941
    %v943 = vrcp.pop %v938
    %v944 = vmul.f32 1.0, %v943
    %v945 = vtanh.pop %v926
    %v946 = vmul.f32 %v942, %v768
    %v947 = vmul.f32 %v940, %v945
    %v948 = vadd.f32 %v946, %v947
    %v949 = vtanh.pop %v948
    %v950 = vmul.f32 %v944, %v949
    %951 = vrot.lane.b32.xlu0 %v950, 64
    %v952 = vpop.permute.xlu0 %951
    %v953 = vmul.f32 %v950, %v952
    %s954 = scalar_lea.vmem [#allocation8], 16
    %955 = vst [vmem:[%s954] sm:$0xff] %v953
    %s956 = scalar_lea.vmem [#allocation2], 96
    %v957 = vld [vmem:[%s956] sm:$0xff]
    %v958 = vld [vmem:[%s956 + $0x8] sm:$0xff]
    %v959 = vld [vmem:[%s956 + $0x10] sm:$0xff]
    %v960 = vld [vmem:[%s956 + $0x18] sm:$0xff]
    %961 = vmatprep.subr.mxu0 %v355
    %962 = vmatpush1.msra.mxu0 %v354
    %963 = vmatprep.subr.mxu0 %v359
    %964 = vmatpush1.msra.mxu0 %v358
    %965 = vmatprep.subr.mxu0 %v363
    %966 = vmatpush1.msra.mxu0 %v362
    %967 = vmatprep.subr.mxu0 %v367
    %968 = vmatpush1.msra.mxu0 %v366
    %969 = vmatprep.subr.mxu0 %v371
    %970 = vmatpush1.msra.mxu0 %v370
    %971 = vmatprep.subr.mxu0 %v375
    %972 = vmatpush1.msra.mxu0 %v374
    %973 = vmatprep.subr.mxu0 %v379
    %974 = vmatpush1.msra.mxu0 %v378
    %975 = vmatprep.subr.mxu0 %v383
    %976 = vmatpush1.msra.mxu0 %v382
    %977 = vmatprep.subr.mxu0 %v387
    %978 = vmatpush1.msra.mxu0 %v386
    %979 = vmatprep.subr.mxu0 %v391
    %980 = vmatpush1.msra.mxu0 %v390
    %981 = vmatprep.subr.mxu0 %v395
    %982 = vmatpush1.msra.mxu0 %v394
    %983 = vmatprep.subr.mxu0 %v399
    %984 = vmatpush1.msra.mxu0 %v398
    %985 = vmatprep.subr.mxu0 %v403
    %986 = vmatpush1.msra.mxu0 %v402
    %987 = vmatprep.subr.mxu0 %v407
    %988 = vmatpush1.msra.mxu0 %v406
    %989 = vmatprep.subr.mxu0 %v411
    %990 = vmatpush1.msra.mxu0 %v410
    %991 = vmatprep.subr.mxu0 %v415
    %992 = vmatpush1.msra.mxu0 %v414
    %993 = vmatprep.subr.mxu0 0.0
    %994 = vmatpush1.msra.mxu0 0.0
    %995 = vmatprep.subr.mxu0 0.0
    %996 = vmatpush1.msra.mxu0 0.0
    %997 = vmatprep.subr.mxu0 0.0
    %998 = vmatpush1.msra.mxu0 0.0
    %999 = vmatprep.subr.mxu0 0.0
    %1000 = vmatpush1.msra.mxu0 0.0
    %1001 = vmatprep.subr.mxu0 0.0
    %1002 = vmatpush1.msra.mxu0 0.0
    %1003 = vmatprep.subr.mxu0 0.0
    %1004 = vmatpush1.msra.mxu0 0.0
    %1005 = vmatprep.subr.mxu0 0.0
    %1006 = vmatpush1.msra.mxu0 0.0
    %1007 = vmatprep.subr.mxu0 0.0
    %1008 = vmatpush1.msra.mxu0 0.0
    %1009 = vmatprep.subr.mxu0 0.0
    %1010 = vmatpush1.msra.mxu0 0.0
    %1011 = vmatprep.subr.mxu0 0.0
    %1012 = vmatpush1.msra.mxu0 0.0
    %1013 = vmatprep.subr.mxu0 0.0
    %1014 = vmatpush1.msra.mxu0 0.0
    %1015 = vmatprep.subr.mxu0 0.0
    %1016 = vmatpush1.msra.mxu0 0.0
    %1017 = vmatprep.subr.mxu0 0.0
    %1018 = vmatpush1.msra.mxu0 0.0
    %1019 = vmatprep.subr.mxu0 0.0
    %1020 = vmatpush1.msra.mxu0 0.0
    %1021 = vmatprep.subr.mxu0 0.0
    %1022 = vmatpush1.msra.mxu0 0.0
    %1023 = vmatprep.subr.mxu0 0.0
    %1024 = vmatpush1.msra.mxu0 0.0
    %1025 = vmatprep.mubr.f32.mxu0 0.0
    %1026 = vmatmul.mubr.f32.gmra.mrb[0].mxu0 %v950
    %v1027 = vpop.f32.mrb[0].mxu0
    %v1028 = vadd.f32 0.0, %v1027
    %v1029 = vpop.f32.mrb[0].mxu0
    %v1030 = vadd.f32 0.0, %v1029
    %1031 = vdwg.mxu0
    %1032 = vmatprep.subr.mxu0 %v357
    %1033 = vmatpush1.msra.mxu0 %v356
    %1034 = vmatprep.subr.mxu0 %v361
    %1035 = vmatpush1.msra.mxu0 %v360
    %1036 = vmatprep.subr.mxu0 %v365
    %1037 = vmatpush1.msra.mxu0 %v364
    %1038 = vmatprep.subr.mxu0 %v369
    %1039 = vmatpush1.msra.mxu0 %v368
    %1040 = vmatprep.subr.mxu0 %v373
    %1041 = vmatpush1.msra.mxu0 %v372
    %1042 = vmatprep.subr.mxu0 %v377
    %1043 = vmatpush1.msra.mxu0 %v376
    %1044 = vmatprep.subr.mxu0 %v381
    %1045 = vmatpush1.msra.mxu0 %v380
    %1046 = vmatprep.subr.mxu0 %v385
    %1047 = vmatpush1.msra.mxu0 %v384
    %1048 = vmatprep.subr.mxu0 %v389
    %1049 = vmatpush1.msra.mxu0 %v388
    %1050 = vmatprep.subr.mxu0 %v393
    %1051 = vmatpush1.msra.mxu0 %v392
    %1052 = vmatprep.subr.mxu0 %v397
    %1053 = vmatpush1.msra.mxu0 %v396
    %1054 = vmatprep.subr.mxu0 %v401
    %1055 = vmatpush1.msra.mxu0 %v400
    %1056 = vmatprep.subr.mxu0 %v405
    %1057 = vmatpush1.msra.mxu0 %v404
    %1058 = vmatprep.subr.mxu0 %v409
    %1059 = vmatpush1.msra.mxu0 %v408
    %1060 = vmatprep.subr.mxu0 %v413
    %1061 = vmatpush1.msra.mxu0 %v412
    %1062 = vmatprep.subr.mxu0 %v417
    %1063 = vmatpush1.msra.mxu0 %v416
    %1064 = vmatprep.subr.mxu0 0.0
    %1065 = vmatpush1.msra.mxu0 0.0
    %1066 = vmatprep.subr.mxu0 0.0
    %1067 = vmatpush1.msra.mxu0 0.0
    %1068 = vmatprep.subr.mxu0 0.0
    %1069 = vmatpush1.msra.mxu0 0.0
    %1070 = vmatprep.subr.mxu0 0.0
    %1071 = vmatpush1.msra.mxu0 0.0
    %1072 = vmatprep.subr.mxu0 0.0
    %1073 = vmatpush1.msra.mxu0 0.0
    %1074 = vmatprep.subr.mxu0 0.0
    %1075 = vmatpush1.msra.mxu0 0.0
    %1076 = vmatprep.subr.mxu0 0.0
    %1077 = vmatpush1.msra.mxu0 0.0
    %1078 = vmatprep.subr.mxu0 0.0
    %1079 = vmatpush1.msra.mxu0 0.0
    %1080 = vmatprep.subr.mxu0 0.0
    %1081 = vmatpush1.msra.mxu0 0.0
    %1082 = vmatprep.subr.mxu0 0.0
    %1083 = vmatpush1.msra.mxu0 0.0
    %1084 = vmatprep.subr.mxu0 0.0
    %1085 = vmatpush1.msra.mxu0 0.0
    %1086 = vmatprep.subr.mxu0 0.0
    %1087 = vmatpush1.msra.mxu0 0.0
    %1088 = vmatprep.subr.mxu0 0.0
    %1089 = vmatpush1.msra.mxu0 0.0
    %1090 = vmatprep.subr.mxu0 0.0
    %1091 = vmatpush1.msra.mxu0 0.0
    %1092 = vmatprep.subr.mxu0 0.0
    %1093 = vmatpush1.msra.mxu0 0.0
    %1094 = vmatprep.subr.mxu0 0.0
    %1095 = vmatpush1.msra.mxu0 0.0
    %1096 = vmatprep.mubr.f32.mxu0 0.0
    %1097 = vmatmul.mubr.f32.gmra.mrb[0].mxu0 %v950
    %v1098 = vpop.f32.mrb[0].mxu0
    %v1099 = vadd.f32 0.0, %v1098
    %v1100 = vpop.f32.mrb[0].mxu0
    %v1101 = vadd.f32 0.0, %v1100
    %1102 = vdwg.mxu0
    %v1103 = vadd.f32 %v957, %v1028
    %v1104 = vadd.f32 %v958, %v1030
    %v1105 = vadd.f32 %v959, %v1099
    %v1106 = vadd.f32 %v960, %v1101
    %v1107 = vxor.u32 %v1103, 2147483648
    %v1108 = vxor.u32 %v1104, 2147483648
    %v1109 = vxor.u32 %v1105, 2147483648
    %v1110 = vmul.f32 %v1107, 1.442695
    %v1111 = vpow.pop %v1110
    %v1112 = vmul.f32 %v1108, 1.442695
    %v1113 = vpow.pop %v1112
    %v1114 = vmul.f32 %v1109, 1.442695
    %v1115 = vpow.pop %v1114
    %v1116 = vadd.f32 %v1111, 1.0
    %v1117 = vadd.f32 %v1113, 1.0
    %v1118 = vadd.f32 %v1115, 1.0
    %v1119 = vrcp.pop %v1116
    %v1120 = vmul.f32 1.0, %v1119
    %v1121 = vrcp.pop %v1117
    %v1122 = vmul.f32 1.0, %v1121
    %v1123 = vrcp.pop %v1118
    %v1124 = vmul.f32 1.0, %v1123
    %v1125 = vtanh.pop %v1106
    %v1126 = vmul.f32 %v1122, %v948
    %v1127 = vmul.f32 %v1120, %v1125
    %v1128 = vadd.f32 %v1126, %v1127
    %v1129 = vtanh.pop %v1128
    %v1130 = vmul.f32 %v1124, %v1129
    %1131 = vrot.lane.b32.xlu0 %v1130, 64
    %v1132 = vpop.permute.xlu0 %1131
    %v1133 = vmul.f32 %v1130, %v1132
    %s1134 = scalar_lea.vmem [#allocation8], 24
    %1135 = vst [vmem:[%s1134] sm:$0xff] %v1133
    %s1136 = scalar_lea.vmem [#allocation2], 128
    %v1137 = vld [vmem:[%s1136] sm:$0xff]
    %v1138 = vld [vmem:[%s1136 + $0x8] sm:$0xff]
    %v1139 = vld [vmem:[%s1136 + $0x10] sm:$0xff]
    %v1140 = vld [vmem:[%s1136 + $0x18] sm:$0xff]
    %1141 = vmatprep.subr.mxu0 %v355
    %1142 = vmatpush1.msra.mxu0 %v354
    %1143 = vmatprep.subr.mxu0 %v359
    %1144 = vmatpush1.msra.mxu0 %v358
    %1145 = vmatprep.subr.mxu0 %v363
    %1146 = vmatpush1.msra.mxu0 %v362
    %1147 = vmatprep.subr.mxu0 %v367
    %1148 = vmatpush1.msra.mxu0 %v366
    %1149 = vmatprep.subr.mxu0 %v371
    %1150 = vmatpush1.msra.mxu0 %v370
    %1151 = vmatprep.subr.mxu0 %v375
    %1152 = vmatpush1.msra.mxu0 %v374
    %1153 = vmatprep.subr.mxu0 %v379
    %1154 = vmatpush1.msra.mxu0 %v378
    %1155 = vmatprep.subr.mxu0 %v383
    %1156 = vmatpush1.msra.mxu0 %v382
    %1157 = vmatprep.subr.mxu0 %v387
    %1158 = vmatpush1.msra.mxu0 %v386
    %1159 = vmatprep.subr.mxu0 %v391
    %1160 = vmatpush1.msra.mxu0 %v390
    %1161 = vmatprep.subr.mxu0 %v395
    %1162 = vmatpush1.msra.mxu0 %v394
    %1163 = vmatprep.subr.mxu0 %v399
    %1164 = vmatpush1.msra.mxu0 %v398
    %1165 = vmatprep.subr.mxu0 %v403
    %1166 = vmatpush1.msra.mxu0 %v402
    %1167 = vmatprep.subr.mxu0 %v407
    %1168 = vmatpush1.msra.mxu0 %v406
    %1169 = vmatprep.subr.mxu0 %v411
    %1170 = vmatpush1.msra.mxu0 %v410
    %1171 = vmatprep.subr.mxu0 %v415
    %1172 = vmatpush1.msra.mxu0 %v414
    %1173 = vmatprep.subr.mxu0 0.0
    %1174 = vmatpush1.msra.mxu0 0.0
    %1175 = vmatprep.subr.mxu0 0.0
    %1176 = vmatpush1.msra.mxu0 0.0
    %1177 = vmatprep.subr.mxu0 0.0
    %1178 = vmatpush1.msra.mxu0 0.0
    %1179 = vmatprep.subr.mxu0 0.0
    %1180 = vmatpush1.msra.mxu0 0.0
    %1181 = vmatprep.subr.mxu0 0.0
    %1182 = vmatpush1.msra.mxu0 0.0
    %1183 = vmatprep.subr.mxu0 0.0
    %1184 = vmatpush1.msra.mxu0 0.0
    %1185 = vmatprep.subr.mxu0 0.0
    %1186 = vmatpush1.msra.mxu0 0.0
    %1187 = vmatprep.subr.mxu0 0.0
    %1188 = vmatpush1.msra.mxu0 0.0
    %1189 = vmatprep.subr.mxu0 0.0
    %1190 = vmatpush1.msra.mxu0 0.0
    %1191 = vmatprep.subr.mxu0 0.0
    %1192 = vmatpush1.msra.mxu0 0.0
    %1193 = vmatprep.subr.mxu0 0.0
    %1194 = vmatpush1.msra.mxu0 0.0
    %1195 = vmatprep.subr.mxu0 0.0
    %1196 = vmatpush1.msra.mxu0 0.0
    %1197 = vmatprep.subr.mxu0 0.0
    %1198 = vmatpush1.msra.mxu0 0.0
    %1199 = vmatprep.subr.mxu0 0.0
    %1200 = vmatpush1.msra.mxu0 0.0
    %1201 = vmatprep.subr.mxu0 0.0
    %1202 = vmatpush1.msra.mxu0 0.0
    %1203 = vmatprep.subr.mxu0 0.0
    %1204 = vmatpush1.msra.mxu0 0.0
    %1205 = vmatprep.mubr.f32.mxu0 0.0
    %1206 = vmatmul.mubr.f32.gmra.mrb[0].mxu0 %v1130
    %v1207 = vpop.f32.mrb[0].mxu0
    %v1208 = vadd.f32 0.0, %v1207
    %v1209 = vpop.f32.mrb[0].mxu0
    %v1210 = vadd.f32 0.0, %v1209
    %1211 = vdwg.mxu0
    %1212 = vmatprep.subr.mxu0 %v357
    %1213 = vmatpush1.msra.mxu0 %v356
    %1214 = vmatprep.subr.mxu0 %v361
    %1215 = vmatpush1.msra.mxu0 %v360
    %1216 = vmatprep.subr.mxu0 %v365
    %1217 = vmatpush1.msra.mxu0 %v364
    %1218 = vmatprep.subr.mxu0 %v369
    %1219 = vmatpush1.msra.mxu0 %v368
    %1220 = vmatprep.subr.mxu0 %v373
    %1221 = vmatpush1.msra.mxu0 %v372
    %1222 = vmatprep.subr.mxu0 %v377
    %1223 = vmatpush1.msra.mxu0 %v376
    %1224 = vmatprep.subr.mxu0 %v381
    %1225 = vmatpush1.msra.mxu0 %v380
    %1226 = vmatprep.subr.mxu0 %v385
    %1227 = vmatpush1.msra.mxu0 %v384
    %1228 = vmatprep.subr.mxu0 %v389
    %1229 = vmatpush1.msra.mxu0 %v388
    %1230 = vmatprep.subr.mxu0 %v393
    %1231 = vmatpush1.msra.mxu0 %v392
    %1232 = vmatprep.subr.mxu0 %v397
    %1233 = vmatpush1.msra.mxu0 %v396
    %1234 = vmatprep.subr.mxu0 %v401
    %1235 = vmatpush1.msra.mxu0 %v400
    %1236 = vmatprep.subr.mxu0 %v405
    %1237 = vmatpush1.msra.mxu0 %v404
    %1238 = vmatprep.subr.mxu0 %v409
    %1239 = vmatpush1.msra.mxu0 %v408
    %1240 = vmatprep.subr.mxu0 %v413
    %1241 = vmatpush1.msra.mxu0 %v412
    %1242 = vmatprep.subr.mxu0 %v417
    %1243 = vmatpush1.msra.mxu0 %v416
    %1244 = vmatprep.subr.mxu0 0.0
    %1245 = vmatpush1.msra.mxu0 0.0
    %1246 = vmatprep.subr.mxu0 0.0
    %1247 = vmatpush1.msra.mxu0 0.0
    %1248 = vmatprep.subr.mxu0 0.0
    %1249 = vmatpush1.msra.mxu0 0.0
    %1250 = vmatprep.subr.mxu0 0.0
    %1251 = vmatpush1.msra.mxu0 0.0
    %1252 = vmatprep.subr.mxu0 0.0
    %1253 = vmatpush1.msra.mxu0 0.0
    %1254 = vmatprep.subr.mxu0 0.0
    %1255 = vmatpush1.msra.mxu0 0.0
    %1256 = vmatprep.subr.mxu0 0.0
    %1257 = vmatpush1.msra.mxu0 0.0
    %1258 = vmatprep.subr.mxu0 0.0
    %1259 = vmatpush1.msra.mxu0 0.0
    %1260 = vmatprep.subr.mxu0 0.0
    %1261 = vmatpush1.msra.mxu0 0.0
    %1262 = vmatprep.subr.mxu0 0.0
    %1263 = vmatpush1.msra.mxu0 0.0
    %1264 = vmatprep.subr.mxu0 0.0
    %1265 = vmatpush1.msra.mxu0 0.0
    %1266 = vmatprep.subr.mxu0 0.0
    %1267 = vmatpush1.msra.mxu0 0.0
    %1268 = vmatprep.subr.mxu0 0.0
    %1269 = vmatpush1.msra.mxu0 0.0
    %1270 = vmatprep.subr.mxu0 0.0
    %1271 = vmatpush1.msra.mxu0 0.0
    %1272 = vmatprep.subr.mxu0 0.0
    %1273 = vmatpush1.msra.mxu0 0.0
    %1274 = vmatprep.subr.mxu0 0.0
    %1275 = vmatpush1.msra.mxu0 0.0
    %1276 = vmatprep.mubr.f32.mxu0 0.0
    %1277 = vmatmul.mubr.f32.gmra.mrb[0].mxu0 %v1130
    %v1278 = vpop.f32.mrb[0].mxu0
    %v1279 = vadd.f32 0.0, %v1278
    %v1280 = vpop.f32.mrb[0].mxu0
    %v1281 = vadd.f32 0.0, %v1280
    %1282 = vdwg.mxu0
    %v1283 = vadd.f32 %v1137, %v1208
    %v1284 = vadd.f32 %v1138, %v1210
    %v1285 = vadd.f32 %v1139, %v1279
    %v1286 = vadd.f32 %v1140, %v1281
    %v1287 = vxor.u32 %v1283, 2147483648
    %v1288 = vxor.u32 %v1284, 2147483648
    %v1289 = vxor.u32 %v1285, 2147483648
    %v1290 = vmul.f32 %v1287, 1.442695
    %v1291 = vpow.pop %v1290
    %v1292 = vmul.f32 %v1288, 1.442695
    %v1293 = vpow.pop %v1292
    %v1294 = vmul.f32 %v1289, 1.442695
    %v1295 = vpow.pop %v1294
    %v1296 = vadd.f32 %v1291, 1.0
    %v1297 = vadd.f32 %v1293, 1.0
    %v1298 = vadd.f32 %v1295, 1.0
    %v1299 = vrcp.pop %v1296
    %v1300 = vmul.f32 1.0, %v1299
    %v1301 = vrcp.pop %v1297
    %v1302 = vmul.f32 1.0, %v1301
    %v1303 = vrcp.pop %v1298
    %v1304 = vmul.f32 1.0, %v1303
    %v1305 = vtanh.pop %v1286
    %v1306 = vmul.f32 %v1302, %v1128
    %v1307 = vmul.f32 %v1300, %v1305
    %v1308 = vadd.f32 %v1306, %v1307
    %v1309 = vtanh.pop %v1308
    %v1310 = vmul.f32 %v1304, %v1309
    %1311 = vrot.lane.b32.xlu0 %v1310, 64
    %v1312 = vpop.permute.xlu0 %1311
    %v1313 = vmul.f32 %v1310, %v1312
    %s1314 = scalar_lea.vmem [#allocation8], 32
    %1315 = vst [vmem:[%s1314] sm:$0xff] %v1313
    %s1316 = scalar_lea.vmem [#allocation2], 160
    %v1317 = vld [vmem:[%s1316] sm:$0xff]
    %v1318 = vld [vmem:[%s1316 + $0x8] sm:$0xff]
    %v1319 = vld [vmem:[%s1316 + $0x10] sm:$0xff]
    %v1320 = vld [vmem:[%s1316 + $0x18] sm:$0xff]
    %1321 = vmatprep.subr.mxu0 %v355
    %1322 = vmatpush1.msra.mxu0 %v354
    %1323 = vmatprep.subr.mxu0 %v359
    %1324 = vmatpush1.msra.mxu0 %v358
    %1325 = vmatprep.subr.mxu0 %v363
    %1326 = vmatpush1.msra.mxu0 %v362
    %1327 = vmatprep.subr.mxu0 %v367
    %1328 = vmatpush1.msra.mxu0 %v366
    %1329 = vmatprep.subr.mxu0 %v371
    %1330 = vmatpush1.msra.mxu0 %v370
    %1331 = vmatprep.subr.mxu0 %v375
    %1332 = vmatpush1.msra.mxu0 %v374
    %1333 = vmatprep.subr.mxu0 %v379
    %1334 = vmatpush1.msra.mxu0 %v378
    %1335 = vmatprep.subr.mxu0 %v383
    %1336 = vmatpush1.msra.mxu0 %v382
    %1337 = vmatprep.subr.mxu0 %v387
    %1338 = vmatpush1.msra.mxu0 %v386
    %1339 = vmatprep.subr.mxu0 %v391
    %1340 = vmatpush1.msra.mxu0 %v390
    %1341 = vmatprep.subr.mxu0 %v395
    %1342 = vmatpush1.msra.mxu0 %v394
    %1343 = vmatprep.subr.mxu0 %v399
    %1344 = vmatpush1.msra.mxu0 %v398
    %1345 = vmatprep.subr.mxu0 %v403
    %1346 = vmatpush1.msra.mxu0 %v402
    %1347 = vmatprep.subr.mxu0 %v407
    %1348 = vmatpush1.msra.mxu0 %v406
    %1349 = vmatprep.subr.mxu0 %v411
    %1350 = vmatpush1.msra.mxu0 %v410
    %1351 = vmatprep.subr.mxu0 %v415
    %1352 = vmatpush1.msra.mxu0 %v414
    %1353 = vmatprep.subr.mxu0 0.0
    %1354 = vmatpush1.msra.mxu0 0.0
    %1355 = vmatprep.subr.mxu0 0.0
    %1356 = vmatpush1.msra.mxu0 0.0
    %1357 = vmatprep.subr.mxu0 0.0
    %1358 = vmatpush1.msra.mxu0 0.0
    %1359 = vmatprep.subr.mxu0 0.0
    %1360 = vmatpush1.msra.mxu0 0.0
    %1361 = vmatprep.subr.mxu0 0.0
    %1362 = vmatpush1.msra.mxu0 0.0
    %1363 = vmatprep.subr.mxu0 0.0
    %1364 = vmatpush1.msra.mxu0 0.0
    %1365 = vmatprep.subr.mxu0 0.0
    %1366 = vmatpush1.msra.mxu0 0.0
    %1367 = vmatprep.subr.mxu0 0.0
    %1368 = vmatpush1.msra.mxu0 0.0
    %1369 = vmatprep.subr.mxu0 0.0
    %1370 = vmatpush1.msra.mxu0 0.0
    %1371 = vmatprep.subr.mxu0 0.0
    %1372 = vmatpush1.msra.mxu0 0.0
    %1373 = vmatprep.subr.mxu0 0.0
    %1374 = vmatpush1.msra.mxu0 0.0
    %1375 = vmatprep.subr.mxu0 0.0
    %1376 = vmatpush1.msra.mxu0 0.0
    %1377 = vmatprep.subr.mxu0 0.0
    %1378 = vmatpush1.msra.mxu0 0.0
    %1379 = vmatprep.subr.mxu0 0.0
    %1380 = vmatpush1.msra.mxu0 0.0
    %1381 = vmatprep.subr.mxu0 0.0
    %1382 = vmatpush1.msra.mxu0 0.0
    %1383 = vmatprep.subr.mxu0 0.0
    %1384 = vmatpush1.msra.mxu0 0.0
    %1385 = vmatprep.mubr.f32.mxu0 0.0
    %1386 = vmatmul.mubr.f32.gmra.mrb[0].mxu0 %v1310
    %v1387 = vpop.f32.mrb[0].mxu0
    %v1388 = vadd.f32 0.0, %v1387
    %v1389 = vpop.f32.mrb[0].mxu0
    %v1390 = vadd.f32 0.0, %v1389
    %1391 = vdwg.mxu0
    %1392 = vmatprep.subr.mxu0 %v357
    %1393 = vmatpush1.msra.mxu0 %v356
    %1394 = vmatprep.subr.mxu0 %v361
    %1395 = vmatpush1.msra.mxu0 %v360
    %1396 = vmatprep.subr.mxu0 %v365
    %1397 = vmatpush1.msra.mxu0 %v364
    %1398 = vmatprep.subr.mxu0 %v369
    %1399 = vmatpush1.msra.mxu0 %v368
    %1400 = vmatprep.subr.mxu0 %v373
    %1401 = vmatpush1.msra.mxu0 %v372
    %1402 = vmatprep.subr.mxu0 %v377
    %1403 = vmatpush1.msra.mxu0 %v376
    %1404 = vmatprep.subr.mxu0 %v381
    %1405 = vmatpush1.msra.mxu0 %v380
    %1406 = vmatprep.subr.mxu0 %v385
    %1407 = vmatpush1.msra.mxu0 %v384
    %1408 = vmatprep.subr.mxu0 %v389
    %1409 = vmatpush1.msra.mxu0 %v388
    %1410 = vmatprep.subr.mxu0 %v393
    %1411 = vmatpush1.msra.mxu0 %v392
    %1412 = vmatprep.subr.mxu0 %v397
    %1413 = vmatpush1.msra.mxu0 %v396
    %1414 = vmatprep.subr.mxu0 %v401
    %1415 = vmatpush1.msra.mxu0 %v400
    %1416 = vmatprep.subr.mxu0 %v405
    %1417 = vmatpush1.msra.mxu0 %v404
    %1418 = vmatprep.subr.mxu0 %v409
    %1419 = vmatpush1.msra.mxu0 %v408
    %1420 = vmatprep.subr.mxu0 %v413
    %1421 = vmatpush1.msra.mxu0 %v412
    %1422 = vmatprep.subr.mxu0 %v417
    %1423 = vmatpush1.msra.mxu0 %v416
    %1424 = vmatprep.subr.mxu0 0.0
    %1425 = vmatpush1.msra.mxu0 0.0
    %1426 = vmatprep.subr.mxu0 0.0
    %1427 = vmatpush1.msra.mxu0 0.0
    %1428 = vmatprep.subr.mxu0 0.0
    %1429 = vmatpush1.msra.mxu0 0.0
    %1430 = vmatprep.subr.mxu0 0.0
    %1431 = vmatpush1.msra.mxu0 0.0
    %1432 = vmatprep.subr.mxu0 0.0
    %1433 = vmatpush1.msra.mxu0 0.0
    %1434 = vmatprep.subr.mxu0 0.0
    %1435 = vmatpush1.msra.mxu0 0.0
    %1436 = vmatprep.subr.mxu0 0.0
    %1437 = vmatpush1.msra.mxu0 0.0
    %1438 = vmatprep.subr.mxu0 0.0
    %1439 = vmatpush1.msra.mxu0 0.0
    %1440 = vmatprep.subr.mxu0 0.0
    %1441 = vmatpush1.msra.mxu0 0.0
    %1442 = vmatprep.subr.mxu0 0.0
    %1443 = vmatpush1.msra.mxu0 0.0
    %1444 = vmatprep.subr.mxu0 0.0
    %1445 = vmatpush1.msra.mxu0 0.0
    %1446 = vmatprep.subr.mxu0 0.0
    %1447 = vmatpush1.msra.mxu0 0.0
    %1448 = vmatprep.subr.mxu0 0.0
    %1449 = vmatpush1.msra.mxu0 0.0
    %1450 = vmatprep.subr.mxu0 0.0
    %1451 = vmatpush1.msra.mxu0 0.0
    %1452 = vmatprep.subr.mxu0 0.0
    %1453 = vmatpush1.msra.mxu0 0.0
    %1454 = vmatprep.subr.mxu0 0.0
    %1455 = vmatpush1.msra.mxu0 0.0
    %1456 = vmatprep.mubr.f32.mxu0 0.0
    %1457 = vmatmul.mubr.f32.gmra.mrb[0].mxu0 %v1310
    %v1458 = vpop.f32.mrb[0].mxu0
    %v1459 = vadd.f32 0.0, %v1458
    %v1460 = vpop.f32.mrb[0].mxu0
    %v1461 = vadd.f32 0.0, %v1460
    %1462 = vdwg.mxu0
    %v1463 = vadd.f32 %v1317, %v1388
    %v1464 = vadd.f32 %v1318, %v1390
    %v1465 = vadd.f32 %v1319, %v1459
    %v1466 = vadd.f32 %v1320, %v1461
    %v1467 = vxor.u32 %v1463, 2147483648
    %v1468 = vxor.u32 %v1464, 2147483648
    %v1469 = vxor.u32 %v1465, 2147483648
    %v1470 = vmul.f32 %v1467, 1.442695
    %v1471 = vpow.pop %v1470
    %v1472 = vmul.f32 %v1468, 1.442695
    %v1473 = vpow.pop %v1472
    %v1474 = vmul.f32 %v1469, 1.442695
    %v1475 = vpow.pop %v1474
    %v1476 = vadd.f32 %v1471, 1.0
    %v1477 = vadd.f32 %v1473, 1.0
    %v1478 = vadd.f32 %v1475, 1.0
    %v1479 = vrcp.pop %v1476
    %v1480 = vmul.f32 1.0, %v1479
    %v1481 = vrcp.pop %v1477
    %v1482 = vmul.f32 1.0, %v1481
    %v1483 = vrcp.pop %v1478
    %v1484 = vmul.f32 1.0, %v1483
    %v1485 = vtanh.pop %v1466
    %v1486 = vmul.f32 %v1482, %v1308
    %v1487 = vmul.f32 %v1480, %v1485
    %v1488 = vadd.f32 %v1486, %v1487
    %v1489 = vtanh.pop %v1488
    %v1490 = vmul.f32 %v1484, %v1489
    %1491 = vrot.lane.b32.xlu0 %v1490, 64
    %v1492 = vpop.permute.xlu0 %1491
    %v1493 = vmul.f32 %v1490, %v1492
    %s1494 = scalar_lea.vmem [#allocation8], 40
    %1495 = vst [vmem:[%s1494] sm:$0xff] %v1493
    %s1496 = scalar_lea.vmem [#allocation2], 192
    %v1497 = vld [vmem:[%s1496] sm:$0xff]
    %v1498 = vld [vmem:[%s1496 + $0x8] sm:$0xff]
    %v1499 = vld [vmem:[%s1496 + $0x10] sm:$0xff]
    %v1500 = vld [vmem:[%s1496 + $0x18] sm:$0xff]
    %1501 = vmatprep.subr.mxu0 %v355
    %1502 = vmatpush1.msra.mxu0 %v354
    %1503 = vmatprep.subr.mxu0 %v359
    %1504 = vmatpush1.msra.mxu0 %v358
    %1505 = vmatprep.subr.mxu0 %v363
    %1506 = vmatpush1.msra.mxu0 %v362
    %1507 = vmatprep.subr.mxu0 %v367
    %1508 = vmatpush1.msra.mxu0 %v366
    %1509 = vmatprep.subr.mxu0 %v371
    %1510 = vmatpush1.msra.mxu0 %v370
    %1511 = vmatprep.subr.mxu0 %v375
    %1512 = vmatpush1.msra.mxu0 %v374
    %1513 = vmatprep.subr.mxu0 %v379
    %1514 = vmatpush1.msra.mxu0 %v378
    %1515 = vmatprep.subr.mxu0 %v383
    %1516 = vmatpush1.msra.mxu0 %v382
    %1517 = vmatprep.subr.mxu0 %v387
    %1518 = vmatpush1.msra.mxu0 %v386
    %1519 = vmatprep.subr.mxu0 %v391
    %1520 = vmatpush1.msra.mxu0 %v390
    %1521 = vmatprep.subr.mxu0 %v395
    %1522 = vmatpush1.msra.mxu0 %v394
    %1523 = vmatprep.subr.mxu0 %v399
    %1524 = vmatpush1.msra.mxu0 %v398
    %1525 = vmatprep.subr.mxu0 %v403
    %1526 = vmatpush1.msra.mxu0 %v402
    %1527 = vmatprep.subr.mxu0 %v407
    %1528 = vmatpush1.msra.mxu0 %v406
    %1529 = vmatprep.subr.mxu0 %v411
    %1530 = vmatpush1.msra.mxu0 %v410
    %1531 = vmatprep.subr.mxu0 %v415
    %1532 = vmatpush1.msra.mxu0 %v414
    %1533 = vmatprep.subr.mxu0 0.0
    %1534 = vmatpush1.msra.mxu0 0.0
    %1535 = vmatprep.subr.mxu0 0.0
    %1536 = vmatpush1.msra.mxu0 0.0
    %1537 = vmatprep.subr.mxu0 0.0
    %1538 = vmatpush1.msra.mxu0 0.0
    %1539 = vmatprep.subr.mxu0 0.0
    %1540 = vmatpush1.msra.mxu0 0.0
    %1541 = vmatprep.subr.mxu0 0.0
    %1542 = vmatpush1.msra.mxu0 0.0
    %1543 = vmatprep.subr.mxu0 0.0
    %1544 = vmatpush1.msra.mxu0 0.0
    %1545 = vmatprep.subr.mxu0 0.0
    %1546 = vmatpush1.msra.mxu0 0.0
    %1547 = vmatprep.subr.mxu0 0.0
    %1548 = vmatpush1.msra.mxu0 0.0
    %1549 = vmatprep.subr.mxu0 0.0
    %1550 = vmatpush1.msra.mxu0 0.0
    %1551 = vmatprep.subr.mxu0 0.0
    %1552 = vmatpush1.msra.mxu0 0.0
    %1553 = vmatprep.subr.mxu0 0.0
    %1554 = vmatpush1.msra.mxu0 0.0
    %1555 = vmatprep.subr.mxu0 0.0
    %1556 = vmatpush1.msra.mxu0 0.0
    %1557 = vmatprep.subr.mxu0 0.0
    %1558 = vmatpush1.msra.mxu0 0.0
    %1559 = vmatprep.subr.mxu0 0.0
    %1560 = vmatpush1.msra.mxu0 0.0
    %1561 = vmatprep.subr.mxu0 0.0
    %1562 = vmatpush1.msra.mxu0 0.0
    %1563 = vmatprep.subr.mxu0 0.0
    %1564 = vmatpush1.msra.mxu0 0.0
    %1565 = vmatprep.mubr.f32.mxu0 0.0
    %1566 = vmatmul.mubr.f32.gmra.mrb[0].mxu0 %v1490
    %v1567 = vpop.f32.mrb[0].mxu0
    %v1568 = vadd.f32 0.0, %v1567
    %v1569 = vpop.f32.mrb[0].mxu0
    %v1570 = vadd.f32 0.0, %v1569
    %1571 = vdwg.mxu0
    %1572 = vmatprep.subr.mxu0 %v357
    %1573 = vmatpush1.msra.mxu0 %v356
    %1574 = vmatprep.subr.mxu0 %v361
    %1575 = vmatpush1.msra.mxu0 %v360
    %1576 = vmatprep.subr.mxu0 %v365
    %1577 = vmatpush1.msra.mxu0 %v364
    %1578 = vmatprep.subr.mxu0 %v369
    %1579 = vmatpush1.msra.mxu0 %v368
    %1580 = vmatprep.subr.mxu0 %v373
    %1581 = vmatpush1.msra.mxu0 %v372
    %1582 = vmatprep.subr.mxu0 %v377
    %1583 = vmatpush1.msra.mxu0 %v376
    %1584 = vmatprep.subr.mxu0 %v381
    %1585 = vmatpush1.msra.mxu0 %v380
    %1586 = vmatprep.subr.mxu0 %v385
    %1587 = vmatpush1.msra.mxu0 %v384
    %1588 = vmatprep.subr.mxu0 %v389
    %1589 = vmatpush1.msra.mxu0 %v388
    %1590 = vmatprep.subr.mxu0 %v393
    %1591 = vmatpush1.msra.mxu0 %v392
    %1592 = vmatprep.subr.mxu0 %v397
    %1593 = vmatpush1.msra.mxu0 %v396
    %1594 = vmatprep.subr.mxu0 %v401
    %1595 = vmatpush1.msra.mxu0 %v400
    %1596 = vmatprep.subr.mxu0 %v405
    %1597 = vmatpush1.msra.mxu0 %v404
    %1598 = vmatprep.subr.mxu0 %v409
    %1599 = vmatpush1.msra.mxu0 %v408
    %1600 = vmatprep.subr.mxu0 %v413
    %1601 = vmatpush1.msra.mxu0 %v412
    %1602 = vmatprep.subr.mxu0 %v417
    %1603 = vmatpush1.msra.mxu0 %v416
    %1604 = vmatprep.subr.mxu0 0.0
    %1605 = vmatpush1.msra.mxu0 0.0
    %1606 = vmatprep.subr.mxu0 0.0
    %1607 = vmatpush1.msra.mxu0 0.0
    %1608 = vmatprep.subr.mxu0 0.0
    %1609 = vmatpush1.msra.mxu0 0.0
    %1610 = vmatprep.subr.mxu0 0.0
    %1611 = vmatpush1.msra.mxu0 0.0
    %1612 = vmatprep.subr.mxu0 0.0
    %1613 = vmatpush1.msra.mxu0 0.0
    %1614 = vmatprep.subr.mxu0 0.0
    %1615 = vmatpush1.msra.mxu0 0.0
    %1616 = vmatprep.subr.mxu0 0.0
    %1617 = vmatpush1.msra.mxu0 0.0
    %1618 = vmatprep.subr.mxu0 0.0
    %1619 = vmatpush1.msra.mxu0 0.0
    %1620 = vmatprep.subr.mxu0 0.0
    %1621 = vmatpush1.msra.mxu0 0.0
    %1622 = vmatprep.subr.mxu0 0.0
    %1623 = vmatpush1.msra.mxu0 0.0
    %1624 = vmatprep.subr.mxu0 0.0
    %1625 = vmatpush1.msra.mxu0 0.0
    %1626 = vmatprep.subr.mxu0 0.0
    %1627 = vmatpush1.msra.mxu0 0.0
    %1628 = vmatprep.subr.mxu0 0.0
    %1629 = vmatpush1.msra.mxu0 0.0
    %1630 = vmatprep.subr.mxu0 0.0
    %1631 = vmatpush1.msra.mxu0 0.0
    %1632 = vmatprep.subr.mxu0 0.0
    %1633 = vmatpush1.msra.mxu0 0.0
    %1634 = vmatprep.subr.mxu0 0.0
    %1635 = vmatpush1.msra.mxu0 0.0
    %1636 = vmatprep.mubr.f32.mxu0 0.0
    %1637 = vmatmul.mubr.f32.gmra.mrb[0].mxu0 %v1490
    %v1638 = vpop.f32.mrb[0].mxu0
    %v1639 = vadd.f32 0.0, %v1638
    %v1640 = vpop.f32.mrb[0].mxu0
    %v1641 = vadd.f32 0.0, %v1640
    %1642 = vdwg.mxu0
    %v1643 = vadd.f32 %v1497, %v1568
    %v1644 = vadd.f32 %v1498, %v1570
    %v1645 = vadd.f32 %v1499, %v1639
    %v1646 = vadd.f32 %v1500, %v1641
    %v1647 = vxor.u32 %v1643, 2147483648
    %v1648 = vxor.u32 %v1644, 2147483648
    %v1649 = vxor.u32 %v1645, 2147483648
    %v1650 = vmul.f32 %v1647, 1.442695
    %v1651 = vpow.pop %v1650
    %v1652 = vmul.f32 %v1648, 1.442695
    %v1653 = vpow.pop %v1652
    %v1654 = vmul.f32 %v1649, 1.442695
    %v1655 = vpow.pop %v1654
    %v1656 = vadd.f32 %v1651, 1.0
    %v1657 = vadd.f32 %v1653, 1.0
    %v1658 = vadd.f32 %v1655, 1.0
    %v1659 = vrcp.pop %v1656
    %v1660 = vmul.f32 1.0, %v1659
    %v1661 = vrcp.pop %v1657
    %v1662 = vmul.f32 1.0, %v1661
    %v1663 = vrcp.pop %v1658
    %v1664 = vmul.f32 1.0, %v1663
    %v1665 = vtanh.pop %v1646
    %v1666 = vmul.f32 %v1662, %v1488
    %v1667 = vmul.f32 %v1660, %v1665
    %v1668 = vadd.f32 %v1666, %v1667
    %v1669 = vtanh.pop %v1668
    %v1670 = vmul.f32 %v1664, %v1669
    %1671 = vrot.lane.b32.xlu0 %v1670, 64
    %v1672 = vpop.permute.xlu0 %1671
    %v1673 = vmul.f32 %v1670, %v1672
    %s1674 = scalar_lea.vmem [#allocation8], 48
    %1675 = vst [vmem:[%s1674] sm:$0xff] %v1673
    %s1676 = scalar_lea.vmem [#allocation2], 224
    %v1677 = vld [vmem:[%s1676] sm:$0xff]
    %v1678 = vld [vmem:[%s1676 + $0x8] sm:$0xff]
    %v1679 = vld [vmem:[%s1676 + $0x10] sm:$0xff]
    %v1680 = vld [vmem:[%s1676 + $0x18] sm:$0xff]
    %1681 = vmatprep.subr.mxu0 %v355
    %1682 = vmatpush1.msra.mxu0 %v354
    %1683 = vmatprep.subr.mxu0 %v359
    %1684 = vmatpush1.msra.mxu0 %v358
    %1685 = vmatprep.subr.mxu0 %v363
    %1686 = vmatpush1.msra.mxu0 %v362
    %1687 = vmatprep.subr.mxu0 %v367
    %1688 = vmatpush1.msra.mxu0 %v366
    %1689 = vmatprep.subr.mxu0 %v371
    %1690 = vmatpush1.msra.mxu0 %v370
    %1691 = vmatprep.subr.mxu0 %v375
    %1692 = vmatpush1.msra.mxu0 %v374
    %1693 = vmatprep.subr.mxu0 %v379
    %1694 = vmatpush1.msra.mxu0 %v378
    %1695 = vmatprep.subr.mxu0 %v383
    %1696 = vmatpush1.msra.mxu0 %v382
    %1697 = vmatprep.subr.mxu0 %v387
    %1698 = vmatpush1.msra.mxu0 %v386
    %1699 = vmatprep.subr.mxu0 %v391
    %1700 = vmatpush1.msra.mxu0 %v390
    %1701 = vmatprep.subr.mxu0 %v395
    %1702 = vmatpush1.msra.mxu0 %v394
    %1703 = vmatprep.subr.mxu0 %v399
    %1704 = vmatpush1.msra.mxu0 %v398
    %1705 = vmatprep.subr.mxu0 %v403
    %1706 = vmatpush1.msra.mxu0 %v402
    %1707 = vmatprep.subr.mxu0 %v407
    %1708 = vmatpush1.msra.mxu0 %v406
    %1709 = vmatprep.subr.mxu0 %v411
    %1710 = vmatpush1.msra.mxu0 %v410
    %1711 = vmatprep.subr.mxu0 %v415
    %1712 = vmatpush1.msra.mxu0 %v414
    %1713 = vmatprep.subr.mxu0 0.0
    %1714 = vmatpush1.msra.mxu0 0.0
    %1715 = vmatprep.subr.mxu0 0.0
    %1716 = vmatpush1.msra.mxu0 0.0
    %1717 = vmatprep.subr.mxu0 0.0
    %1718 = vmatpush1.msra.mxu0 0.0
    %1719 = vmatprep.subr.mxu0 0.0
    %1720 = vmatpush1.msra.mxu0 0.0
    %1721 = vmatprep.subr.mxu0 0.0
    %1722 = vmatpush1.msra.mxu0 0.0
    %1723 = vmatprep.subr.mxu0 0.0
    %1724 = vmatpush1.msra.mxu0 0.0
    %1725 = vmatprep.subr.mxu0 0.0
    %1726 = vmatpush1.msra.mxu0 0.0
    %1727 = vmatprep.subr.mxu0 0.0
    %1728 = vmatpush1.msra.mxu0 0.0
    %1729 = vmatprep.subr.mxu0 0.0
    %1730 = vmatpush1.msra.mxu0 0.0
    %1731 = vmatprep.subr.mxu0 0.0
    %1732 = vmatpush1.msra.mxu0 0.0
    %1733 = vmatprep.subr.mxu0 0.0
    %1734 = vmatpush1.msra.mxu0 0.0
    %1735 = vmatprep.subr.mxu0 0.0
    %1736 = vmatpush1.msra.mxu0 0.0
    %1737 = vmatprep.subr.mxu0 0.0
    %1738 = vmatpush1.msra.mxu0 0.0
    %1739 = vmatprep.subr.mxu0 0.0
    %1740 = vmatpush1.msra.mxu0 0.0
    %1741 = vmatprep.subr.mxu0 0.0
    %1742 = vmatpush1.msra.mxu0 0.0
    %1743 = vmatprep.subr.mxu0 0.0
    %1744 = vmatpush1.msra.mxu0 0.0
    %1745 = vmatprep.mubr.f32.mxu0 0.0
    %1746 = vmatmul.mubr.f32.gmra.mrb[0].mxu0 %v1670
    %v1747 = vpop.f32.mrb[0].mxu0
    %v1748 = vadd.f32 0.0, %v1747
    %v1749 = vpop.f32.mrb[0].mxu0
    %v1750 = vadd.f32 0.0, %v1749
    %1751 = vdwg.mxu0
    %1752 = vmatprep.subr.mxu0 %v357
    %1753 = vmatpush1.msra.mxu0 %v356
    %1754 = vmatprep.subr.mxu0 %v361
    %1755 = vmatpush1.msra.mxu0 %v360
    %1756 = vmatprep.subr.mxu0 %v365
    %1757 = vmatpush1.msra.mxu0 %v364
    %1758 = vmatprep.subr.mxu0 %v369
    %1759 = vmatpush1.msra.mxu0 %v368
    %1760 = vmatprep.subr.mxu0 %v373
    %1761 = vmatpush1.msra.mxu0 %v372
    %1762 = vmatprep.subr.mxu0 %v377
    %1763 = vmatpush1.msra.mxu0 %v376
    %1764 = vmatprep.subr.mxu0 %v381
    %1765 = vmatpush1.msra.mxu0 %v380
    %1766 = vmatprep.subr.mxu0 %v385
    %1767 = vmatpush1.msra.mxu0 %v384
    %1768 = vmatprep.subr.mxu0 %v389
    %1769 = vmatpush1.msra.mxu0 %v388
    %1770 = vmatprep.subr.mxu0 %v393
    %1771 = vmatpush1.msra.mxu0 %v392
    %1772 = vmatprep.subr.mxu0 %v397
    %1773 = vmatpush1.msra.mxu0 %v396
    %1774 = vmatprep.subr.mxu0 %v401
    %1775 = vmatpush1.msra.mxu0 %v400
    %1776 = vmatprep.subr.mxu0 %v405
    %1777 = vmatpush1.msra.mxu0 %v404
    %1778 = vmatprep.subr.mxu0 %v409
    %1779 = vmatpush1.msra.mxu0 %v408
    %1780 = vmatprep.subr.mxu0 %v413
    %1781 = vmatpush1.msra.mxu0 %v412
    %1782 = vmatprep.subr.mxu0 %v417
    %1783 = vmatpush1.msra.mxu0 %v416
    %1784 = vmatprep.subr.mxu0 0.0
    %1785 = vmatpush1.msra.mxu0 0.0
    %1786 = vmatprep.subr.mxu0 0.0
    %1787 = vmatpush1.msra.mxu0 0.0
    %1788 = vmatprep.subr.mxu0 0.0
    %1789 = vmatpush1.msra.mxu0 0.0
    %1790 = vmatprep.subr.mxu0 0.0
    %1791 = vmatpush1.msra.mxu0 0.0
    %1792 = vmatprep.subr.mxu0 0.0
    %1793 = vmatpush1.msra.mxu0 0.0
    %1794 = vmatprep.subr.mxu0 0.0
    %1795 = vmatpush1.msra.mxu0 0.0
    %1796 = vmatprep.subr.mxu0 0.0
    %1797 = vmatpush1.msra.mxu0 0.0
    %1798 = vmatprep.subr.mxu0 0.0
    %1799 = vmatpush1.msra.mxu0 0.0
    %1800 = vmatprep.subr.mxu0 0.0
    %1801 = vmatpush1.msra.mxu0 0.0
    %1802 = vmatprep.subr.mxu0 0.0
    %1803 = vmatpush1.msra.mxu0 0.0
    %1804 = vmatprep.subr.mxu0 0.0
    %1805 = vmatpush1.msra.mxu0 0.0
    %1806 = vmatprep.subr.mxu0 0.0
    %1807 = vmatpush1.msra.mxu0 0.0
    %1808 = vmatprep.subr.mxu0 0.0
    %1809 = vmatpush1.msra.mxu0 0.0
    %1810 = vmatprep.subr.mxu0 0.0
    %1811 = vmatpush1.msra.mxu0 0.0
    %1812 = vmatprep.subr.mxu0 0.0
    %1813 = vmatpush1.msra.mxu0 0.0
    %1814 = vmatprep.subr.mxu0 0.0
    %1815 = vmatpush1.msra.mxu0 0.0
    %1816 = vmatprep.mubr.f32.mxu0 0.0
    %1817 = vmatmul.mubr.f32.gmra.mrb[0].mxu0 %v1670
    %v1818 = vpop.f32.mrb[0].mxu0
    %v1819 = vadd.f32 0.0, %v1818
    %v1820 = vpop.f32.mrb[0].mxu0
    %v1821 = vadd.f32 0.0, %v1820
    %1822 = vdwg.mxu0
    %v1823 = vadd.f32 %v1677, %v1748
    %v1824 = vadd.f32 %v1678, %v1750
    %v1825 = vadd.f32 %v1679, %v1819
    %v1826 = vadd.f32 %v1680, %v1821
    %v1827 = vxor.u32 %v1823, 2147483648
    %v1828 = vxor.u32 %v1824, 2147483648
    %v1829 = vxor.u32 %v1825, 2147483648
    %v1830 = vmul.f32 %v1827, 1.442695
    %v1831 = vpow.pop %v1830
    %v1832 = vmul.f32 %v1828, 1.442695
    %v1833 = vpow.pop %v1832
    %v1834 = vmul.f32 %v1829, 1.442695
    %v1835 = vpow.pop %v1834
    %v1836 = vadd.f32 %v1831, 1.0
    %v1837 = vadd.f32 %v1833, 1.0
    %v1838 = vadd.f32 %v1835, 1.0
    %v1839 = vrcp.pop %v1836
    %v1840 = vmul.f32 1.0, %v1839
    %v1841 = vrcp.pop %v1837
    %v1842 = vmul.f32 1.0, %v1841
    %v1843 = vrcp.pop %v1838
    %v1844 = vmul.f32 1.0, %v1843
    %v1845 = vtanh.pop %v1826
    %v1846 = vmul.f32 %v1842, %v1668
    %v1847 = vmul.f32 %v1840, %v1845
    %v1848 = vadd.f32 %v1846, %v1847
    %v1849 = vtanh.pop %v1848
    %v1850 = vmul.f32 %v1844, %v1849
    %1851 = vrot.lane.b32.xlu0 %v1850, 64
    %v1852 = vpop.permute.xlu0 %1851
    %v1853 = vmul.f32 %v1850, %v1852
    %s1854 = scalar_lea.vmem [#allocation8], 56
    %1855 = vst [vmem:[%s1854] sm:$0xff] %v1853
    // Predicated region
    $region22: #{tpu_custom_call.1} parent=1 // pred_check
      _
    $region23: #{tpu_custom_call.1} parent=1 // pred_check_branch
      %1857 = sbr.rel (0) target = $region25
    $region24: #{tpu_custom_call.1} parent=1 // pred_region
      %s1859 = ssub.s32 1024, 1024
      %1860 = vsyncadd [#allocation5], %s1859
      %s1861 = sshll.u32 [#allocation8], 4
      %s1862 = int_to_ptr.vmem [resolvable:$true] %s1861
      %1867 = dma.vmem_to_hbm [thread:$0]  %s1862, 1024, %s3, [#allocation5], 128, 128, 8
    $region25: #{tpu_custom_call.1} parent=1 // pred_fallthru
      _
    // Predicated region
    $region26: #{tpu_custom_call.1} parent=1 // pred_check
      _
    $region27: #{tpu_custom_call.1} parent=1 // pred_check_branch
      %1869 = sbr.rel (0) target = $region29
    $region28: #{tpu_custom_call.1} parent=1 // pred_region
      %1870 = dma.done [#allocation5], 1024
    $region29: #{tpu_custom_call.1} parent=1 // pred_fallthru
      _
    %1871 = vsyncpa [#allocation4], 1
    %1872 = vsyncpa [#allocation7], 1
    %1873 = vsyncpa [#allocation5], 1

</llo_original>
